<compile_context>
chip_gen: v7x
topology: tpu7x:2x2x1
jax: 0.10.0
libtpu: 0.0.40
codegen_flags: <defaults>
</compile_context>

<pallas_src>
import functools
import jax
import jax.numpy as jnp
from jax import lax
from jax.experimental import pallas as pl
from jax.experimental.pallas import tpu as pltpu


def _silu(x):
    return x * jax.nn.sigmoid(x)


def _round_up(x, m):
    return (x + m - 1) // m * m


def _device_kind():
    try:
        return jax.devices()[0].device_kind.lower()
    except Exception:
        return ""


def _no3_kernel(theta_ref, t_ref,
                ew0_ref, eb0_ref, elw_ref, elb_ref, ewl_ref, ebl_ref,
                vw_ref, vb_ref,
                out_ref,
                *, depth, sigma, T, time_scale):
    theta = theta_ref[...]                                  # (TB, dim_p) f32
    t = t_ref[...] * (1.0 / time_scale)                     # (TB, 1)    f32

    # --- E(t): residual MLP, input dim = 1 -------------------------------
    # first layer: in_dim == 1 -> broadcasted scale + bias (no MXU needed)
    h = _silu(t * ew0_ref[...] + eb0_ref[...])              # (TB, width_p) f32
    for d in range(depth):                                  # static unroll
        z = jnp.dot(h.astype(elw_ref.dtype), elw_ref[d],
                    preferred_element_type=jnp.float32) + elb_ref[d]
        h = h + _silu(z)
    emb_t = (jnp.dot(h.astype(ewl_ref.dtype), ewl_ref[...],
                     preferred_element_type=jnp.float32)
             + ebl_ref[...])                                # (TB, dim_p) f32

    # --- combine ----------------------------------------------------------
    data = _silu(theta + emb_t)                             # (TB, dim_p)
    v = (jnp.dot(data.astype(vw_ref.dtype), vw_ref[...],
                 preferred_element_type=jnp.float32)
         + vb_ref[...])                                     # (TB, dim_p)

    # Epilogue: single EUP rsqrt; algebraically exact, no cancellation as
    # t -> 0 (c_out == 0 exactly at t == 0).
    tT = t * (1.0 / T)
    s2 = sigma * sigma
    r = lax.rsqrt(s2 + tT * tT)                             # (TB, 1)
    c_skip = s2 * (r * r)                                   # s2 / (s2 + tT^2)
    c_out = sigma * (jnp.abs(tT) * r)                       # sigma*sqrt(1-c_skip)
    out_ref[...] = theta * c_skip + v * c_out


def no3_2_forward(theta, t, params, *, sigma=0.5, T=0.1, time_scale=1.0,
                  tile_b=None, weight_dtype=jnp.bfloat16):
    """theta: (*bs, dim), t: (*bs,) -> (*bs, dim)"""
    input_shape = theta.shape
    dim = input_shape[-1]
    theta2 = theta.reshape(-1, dim).astype(jnp.float32)
    t2 = t.reshape(-1, 1).astype(jnp.float32)
    B = theta2.shape[0]

    ew0, eb0, elw, elb, ewl, ebl, vw, vb = params
    depth = elw.shape[0]
    width = elw.shape[1]

    # Lane-dense padded feature dims (multiples of 128).
    dim_p = max(_round_up(dim, 128), 128)
    width_p = max(_round_up(width, 128), 128)

    def pad_to(a, shape):
        pads = [(0, s - d) for d, s in zip(a.shape, shape)]
        return jnp.pad(a, pads) if any(p[1] for p in pads) else a

    # Zero-padding is exact: padded lanes of every intermediate stay 0
    # (silu(0)=0 and padded weight rows/cols are 0), so real lanes are
    # bit-identical modulo dtype.
    ew0p = pad_to(ew0, (1, width_p)).astype(jnp.float32)
    eb0p = pad_to(eb0, (1, width_p)).astype(jnp.float32)
    elwp = pad_to(elw, (depth, width_p, width_p)).astype(weight_dtype)
    elbp = pad_to(elb, (depth, 1, width_p)).astype(jnp.float32)
    ewlp = pad_to(ewl, (width_p, dim_p)).astype(weight_dtype)
    eblp = pad_to(ebl, (1, dim_p)).astype(jnp.float32)
    vwp = pad_to(vw, (dim_p, dim_p)).astype(weight_dtype)
    vbp = pad_to(vb, (1, dim_p)).astype(jnp.float32)

    kind = _device_kind()
    is_v5e = ("v5e" in kind) or ("v5 lite" in kind) or ("v5lite" in kind)
    if tile_b is None:
        # v5e: 4x128^2 MXU, DMA-bound regime -> 128 rows.
        # v6e/v7x: 2x256^2 MXU -> 256 rows amortize weight push/drain.
        tile_b = 128 if is_v5e else 256

    # Shrink (to a multiple of 8) for tiny batches so we don't pad 8 rows up
    # to 256.
    tile_b = max(8, min(tile_b, _round_up(B, 8)))
    B8 = _round_up(B, 8)
    # Guarantee >= 2 grid steps when the batch allows it so the "parallel"
    # axis can shard across both TensorCores on 2-TC chips (v7x / megacore).
    if B8 >= 256:
        tile_b = min(tile_b, max(128, (B8 // 2) // 8 * 8))
    B_pad = _round_up(B, tile_b)

    theta_p = pad_to(theta2, (B_pad, dim_p))
    t_p = pad_to(t2, (B_pad, 1))

    weights = (ew0p, eb0p, elwp, elbp, ewlp, eblp, vwp, vbp)
    weight_bytes = int(sum(a.size * a.dtype.itemsize for a in weights))
    io_tile_bytes = tile_b * (2 * dim_p + 1) * 4

    try:
        vmem_cap = int(pltpu.get_tpu_info().vmem_capacity_bytes)
    except Exception:
        vmem_cap = 64 << 20            # most restrictive per-TC size (v7x)

    cost = pl.CostEstimate(
        flops=int(2 * B_pad * (depth * width_p * width_p
                               + width_p * dim_p + dim_p * dim_p)),
        transcendentals=int(B_pad * (width_p * (depth + 1) + 2 * dim_p)),
        bytes_accessed=int(weight_bytes + B_pad * (2 * dim_p + 1) * 4),
    )

    kernel = functools.partial(_no3_kernel, depth=depth, sigma=sigma,
                               T=T, time_scale=time_scale)

    def build(single_buffer_weights):
        if single_buffer_weights:
            # Grid-invariant weights: one pipeline buffer (index_map is
            # constant across the batch grid, double-buffering buys nothing).
            full = lambda a: pl.BlockSpec(a.shape, lambda i: (0,) * a.ndim,
                                          pipeline_mode=pl.Buffered(1))
            wb = 1
        else:
            full = lambda a: pl.BlockSpec(a.shape, lambda i: (0,) * a.ndim)
            wb = 2
        vmem_limit = wb * weight_bytes + 4 * io_tile_bytes + (8 << 20)
        vmem_limit = max(vmem_limit, 32 << 20)
        vmem_limit = min(vmem_limit, vmem_cap - (4 << 20))
        return pl.pallas_call(
            kernel,
            out_shape=jax.ShapeDtypeStruct((B_pad, dim_p), jnp.float32),
            grid_spec=pltpu.PrefetchScalarGridSpec(
                num_scalar_prefetch=0,
                grid=(B_pad // tile_b,),
                in_specs=[
                    pl.BlockSpec((tile_b, dim_p), lambda i: (i, 0)),  # theta
                    pl.BlockSpec((tile_b, 1), lambda i: (i, 0)),      # t
                    full(ew0p), full(eb0p), full(elwp), full(elbp),
                    full(ewlp), full(eblp), full(vwp), full(vbp),
                ],
                out_specs=pl.BlockSpec((tile_b, dim_p), lambda i: (i, 0)),
            ),
            compiler_params=pltpu.CompilerParams(
                dimension_semantics=("parallel",),
                vmem_limit_bytes=int(vmem_limit)),
            cost_estimate=cost,
        )

    try:
        out = build(True)(theta_p, t_p, *weights)
    except Exception:
        # Fallback: default (double-buffered) weight specs — the previously
        # verified-clean path — in case pipeline_mode is rejected.
        out = build(False)(theta_p, t_p, *weights)

    out = out[:B, :dim]
    return out.reshape(input_shape)


def init_params(key, dim, width, depth):
    """Deterministic PyTorch-Linear-style init; weights stored (in, out)."""
    ks = jax.random.split(key, 8)

    def lin(k, fan_in, shape):
        bound = 1.0 / jnp.sqrt(jnp.float32(fan_in))
        return jax.random.uniform(k, shape, jnp.float32, -bound, bound)

    ew0 = lin(ks[0], 1, (1, width))                 # ResNet first: 1 -> width
    eb0 = lin(ks[1], 1, (1, width))
    elw = lin(ks[2], width, (depth, width, width))  # residual blocks
    elb = lin(ks[3], width, (depth, 1, width))
    ewl = lin(ks[4], width, (width, dim))           # ResNet last: width -> dim
    ebl = lin(ks[5], width, (1, dim))
    vw = lin(ks[6], dim, (dim, dim))                # V: dim -> dim
    vb = lin(ks[7], dim, (1, dim))
    return (ew0, eb0, elw, elb, ewl, ebl, vw, vb)


def _reference(theta, t, params, sigma, T, time_scale):
    ew0, eb0, elw, elb, ewl, ebl, vw, vb = params
    shp = theta.shape
    th = theta.reshape(-1, shp[-1]).astype(jnp.float32)
    tt = t.reshape(-1, 1).astype(jnp.float32) / time_scale
    h = _silu(tt @ ew0 + eb0)
    for d in range(elw.shape[0]):
        h = h + _silu(h @ elw[d] + elb[d])
    emb = h @ ewl + ebl
    data = _silu(th + emb)
    v = data @ vw + vb
    tT = tt / T
    c_skip = sigma**2 / (sigma**2 + tT**2)
    c_out = jnp.sqrt(1.0 - c_skip) * sigma
    return (th * c_skip + v * c_out).reshape(shp)


if __name__ == "__main__":
    # small shapes consistent with the module (dim=970, width=1000, depth=5
    # in the original; scaled down here)
    dim, width, depth = 32, 64, 5
    sigma, T, time_scale = 0.5, 0.1, 1.0

    key = jax.random.PRNGKey(0)
    k_p, k_theta, k_t = jax.random.split(key, 3)
    params = init_params(k_p, dim, width, depth)

    # batched input with extra leading dims to exercise the reshape path
    theta = jax.random.normal(k_theta, (2, 4, dim), jnp.float32)
    t = jax.random.uniform(k_t, (2, 4), jnp.float32)

    out = no3_2_forward(theta, t, params, sigma=sigma, T=T,
                        time_scale=time_scale)
    out = jax.block_until_ready(out)

    ref = _reference(theta, t, params, sigma, T, time_scale)
    assert out.shape == theta.shape
    # bf16 matmul weights -> tolerance loosened vs. f32 reference
    assert jnp.allclose(out, ref, atol=3e-2, rtol=3e-2), "mismatch vs reference"

    print("KERNEL_OK")
</pallas_src>

<mosaic_0001>
module attributes {stable_mosaic.version = 11 : i64} {
  func.func @_no3_kernel(%arg0: i32, %arg1: memref<8x128xf32, #tpu.memory_space<vmem>>, %arg2: memref<8x1xf32, #tpu.memory_space<vmem>>, %arg3: memref<1x128xf32, #tpu.memory_space<vmem>>, %arg4: memref<1x128xf32, #tpu.memory_space<vmem>>, %arg5: memref<5x128x128xbf16, #tpu.memory_space<vmem>>, %arg6: memref<5x1x128xf32, #tpu.memory_space<vmem>>, %arg7: memref<128x128xbf16, #tpu.memory_space<vmem>>, %arg8: memref<1x128xf32, #tpu.memory_space<vmem>>, %arg9: memref<128x128xbf16, #tpu.memory_space<vmem>>, %arg10: memref<1x128xf32, #tpu.memory_space<vmem>>, %arg11: memref<8x128xf32, #tpu.memory_space<vmem>>) attributes {dimension_semantics = [#tpu.dimension_semantics<parallel>], iteration_bounds = array<i64: 1>, scalar_prefetch = 0 : i64, scratch_operands = 0 : i64, tpu.core_type = #tpu.core_type<tc>, window_params = [{transform_indices = @transform_0, window_bounds = array<i64: 8, 128>}, {transform_indices = @transform_1, window_bounds = array<i64: 8, 1>}, {pipeline_mode = #tpu.pipeline_mode<synchronous>, transform_indices = @transform_2, window_bounds = array<i64: 1, 128>}, {pipeline_mode = #tpu.pipeline_mode<synchronous>, transform_indices = @transform_3, window_bounds = array<i64: 1, 128>}, {pipeline_mode = #tpu.pipeline_mode<synchronous>, transform_indices = @transform_4, window_bounds = array<i64: 5, 128, 128>}, {pipeline_mode = #tpu.pipeline_mode<synchronous>, transform_indices = @transform_5, window_bounds = array<i64: 5, 1, 128>}, {pipeline_mode = #tpu.pipeline_mode<synchronous>, transform_indices = @transform_6, window_bounds = array<i64: 128, 128>}, {pipeline_mode = #tpu.pipeline_mode<synchronous>, transform_indices = @transform_7, window_bounds = array<i64: 1, 128>}, {pipeline_mode = #tpu.pipeline_mode<synchronous>, transform_indices = @transform_8, window_bounds = array<i64: 128, 128>}, {pipeline_mode = #tpu.pipeline_mode<synchronous>, transform_indices = @transform_9, window_bounds = array<i64: 1, 128>}, {transform_indices = @transform_10, window_bounds = array<i64: 8, 128>}]} {
    %c0 = arith.constant 0 : index
    %c0_0 = arith.constant 0 : index
    %0 = vector.load %arg1[%c0, %c0_0] : memref<8x128xf32, #tpu.memory_space<vmem>>, vector<8x128xf32>
    %c0_1 = arith.constant 0 : index
    %c0_2 = arith.constant 0 : index
    %1 = vector.load %arg2[%c0_1, %c0_2] : memref<8x1xf32, #tpu.memory_space<vmem>>, vector<8x1xf32>
    %cst = arith.constant 1.000000e+00 : f32
    %2 = vector.broadcast %cst : f32 to vector<8x1xf32>
    %3 = arith.mulf %1, %2 : vector<8x1xf32>
    %c0_3 = arith.constant 0 : index
    %c0_4 = arith.constant 0 : index
    %4 = vector.load %arg3[%c0_3, %c0_4] : memref<1x128xf32, #tpu.memory_space<vmem>>, vector<1x128xf32>
    %5 = vector.broadcast %3 : vector<8x1xf32> to vector<8x128xf32>
    %6 = vector.broadcast %4 : vector<1x128xf32> to vector<8x128xf32>
    %7 = arith.mulf %5, %6 : vector<8x128xf32>
    %c0_5 = arith.constant 0 : index
    %c0_6 = arith.constant 0 : index
    %8 = vector.load %arg4[%c0_5, %c0_6] : memref<1x128xf32, #tpu.memory_space<vmem>>, vector<1x128xf32>
    %9 = vector.broadcast %8 : vector<1x128xf32> to vector<8x128xf32>
    %10 = arith.addf %7, %9 : vector<8x128xf32>
    %11 = arith.negf %10 : vector<8x128xf32>
    %12 = math.exp %11 : vector<8x128xf32>
    %cst_7 = arith.constant 1.000000e+00 : f32
    %13 = vector.broadcast %cst_7 : f32 to vector<8x128xf32>
    %14 = arith.addf %13, %12 : vector<8x128xf32>
    %15 = arith.divf %13, %14 : vector<8x128xf32>
    %16 = arith.mulf %10, %15 : vector<8x128xf32>
    %17 = arith.truncf %16 : vector<8x128xf32> to vector<8x128xbf16>
    %c0_8 = arith.constant 0 : index
    %c0_9 = arith.constant 0 : index
    %c0_10 = arith.constant 0 : index
    %18 = vector.load %arg5[%c0_8, %c0_9, %c0_10] : memref<5x128x128xbf16, #tpu.memory_space<vmem>>, vector<1x128x128xbf16>
    %19 = vector.shape_cast %18 : vector<1x128x128xbf16> to vector<128x128xbf16>
    %cst_11 = arith.constant dense<0.000000e+00> : vector<8x128xf32>
    %20 = tpu.matmul %17, %19, %cst_11 {dimension_numbers = #tpu.dot_dimension_numbers<[1], [0], [0], [1], [0, 0, 1, 1], [], []>} : vector<8x128xbf16>, vector<128x128xbf16>, vector<8x128xf32> -> vector<8x128xf32>
    %c0_12 = arith.constant 0 : index
    %c0_13 = arith.constant 0 : index
    %c0_14 = arith.constant 0 : index
    %21 = vector.load %arg6[%c0_12, %c0_13, %c0_14] : memref<5x1x128xf32, #tpu.memory_space<vmem>>, vector<1x1x128xf32>
    %22 = vector.shape_cast %21 : vector<1x1x128xf32> to vector<1x128xf32>
    %23 = vector.broadcast %22 : vector<1x128xf32> to vector<8x128xf32>
    %24 = arith.addf %20, %23 : vector<8x128xf32>
    %25 = arith.negf %24 : vector<8x128xf32>
    %26 = math.exp %25 : vector<8x128xf32>
    %cst_15 = arith.constant 1.000000e+00 : f32
    %27 = vector.broadcast %cst_15 : f32 to vector<8x128xf32>
    %28 = arith.addf %27, %26 : vector<8x128xf32>
    %29 = arith.divf %27, %28 : vector<8x128xf32>
    %30 = arith.mulf %24, %29 : vector<8x128xf32>
    %31 = arith.addf %16, %30 : vector<8x128xf32>
    %32 = arith.truncf %31 : vector<8x128xf32> to vector<8x128xbf16>
    %c1 = arith.constant 1 : index
    %c0_16 = arith.constant 0 : index
    %c0_17 = arith.constant 0 : index
    %33 = vector.load %arg5[%c1, %c0_16, %c0_17] : memref<5x128x128xbf16, #tpu.memory_space<vmem>>, vector<1x128x128xbf16>
    %34 = vector.shape_cast %33 : vector<1x128x128xbf16> to vector<128x128xbf16>
    %cst_18 = arith.constant dense<0.000000e+00> : vector<8x128xf32>
    %35 = tpu.matmul %32, %34, %cst_18 {dimension_numbers = #tpu.dot_dimension_numbers<[1], [0], [0], [1], [0, 0, 1, 1], [], []>} : vector<8x128xbf16>, vector<128x128xbf16>, vector<8x128xf32> -> vector<8x128xf32>
    %c1_19 = arith.constant 1 : index
    %c0_20 = arith.constant 0 : index
    %c0_21 = arith.constant 0 : index
    %36 = vector.load %arg6[%c1_19, %c0_20, %c0_21] : memref<5x1x128xf32, #tpu.memory_space<vmem>>, vector<1x1x128xf32>
    %37 = vector.shape_cast %36 : vector<1x1x128xf32> to vector<1x128xf32>
    %38 = vector.broadcast %37 : vector<1x128xf32> to vector<8x128xf32>
    %39 = arith.addf %35, %38 : vector<8x128xf32>
    %40 = arith.negf %39 : vector<8x128xf32>
    %41 = math.exp %40 : vector<8x128xf32>
    %cst_22 = arith.constant 1.000000e+00 : f32
    %42 = vector.broadcast %cst_22 : f32 to vector<8x128xf32>
    %43 = arith.addf %42, %41 : vector<8x128xf32>
    %44 = arith.divf %42, %43 : vector<8x128xf32>
    %45 = arith.mulf %39, %44 : vector<8x128xf32>
    %46 = arith.addf %31, %45 : vector<8x128xf32>
    %47 = arith.truncf %46 : vector<8x128xf32> to vector<8x128xbf16>
    %c2 = arith.constant 2 : index
    %c0_23 = arith.constant 0 : index
    %c0_24 = arith.constant 0 : index
    %48 = vector.load %arg5[%c2, %c0_23, %c0_24] : memref<5x128x128xbf16, #tpu.memory_space<vmem>>, vector<1x128x128xbf16>
    %49 = vector.shape_cast %48 : vector<1x128x128xbf16> to vector<128x128xbf16>
    %cst_25 = arith.constant dense<0.000000e+00> : vector<8x128xf32>
    %50 = tpu.matmul %47, %49, %cst_25 {dimension_numbers = #tpu.dot_dimension_numbers<[1], [0], [0], [1], [0, 0, 1, 1], [], []>} : vector<8x128xbf16>, vector<128x128xbf16>, vector<8x128xf32> -> vector<8x128xf32>
    %c2_26 = arith.constant 2 : index
    %c0_27 = arith.constant 0 : index
    %c0_28 = arith.constant 0 : index
    %51 = vector.load %arg6[%c2_26, %c0_27, %c0_28] : memref<5x1x128xf32, #tpu.memory_space<vmem>>, vector<1x1x128xf32>
    %52 = vector.shape_cast %51 : vector<1x1x128xf32> to vector<1x128xf32>
    %53 = vector.broadcast %52 : vector<1x128xf32> to vector<8x128xf32>
    %54 = arith.addf %50, %53 : vector<8x128xf32>
    %55 = arith.negf %54 : vector<8x128xf32>
    %56 = math.exp %55 : vector<8x128xf32>
    %cst_29 = arith.constant 1.000000e+00 : f32
    %57 = vector.broadcast %cst_29 : f32 to vector<8x128xf32>
    %58 = arith.addf %57, %56 : vector<8x128xf32>
    %59 = arith.divf %57, %58 : vector<8x128xf32>
    %60 = arith.mulf %54, %59 : vector<8x128xf32>
    %61 = arith.addf %46, %60 : vector<8x128xf32>
    %62 = arith.truncf %61 : vector<8x128xf32> to vector<8x128xbf16>
    %c3 = arith.constant 3 : index
    %c0_30 = arith.constant 0 : index
    %c0_31 = arith.constant 0 : index
    %63 = vector.load %arg5[%c3, %c0_30, %c0_31] : memref<5x128x128xbf16, #tpu.memory_space<vmem>>, vector<1x128x128xbf16>
    %64 = vector.shape_cast %63 : vector<1x128x128xbf16> to vector<128x128xbf16>
    %cst_32 = arith.constant dense<0.000000e+00> : vector<8x128xf32>
    %65 = tpu.matmul %62, %64, %cst_32 {dimension_numbers = #tpu.dot_dimension_numbers<[1], [0], [0], [1], [0, 0, 1, 1], [], []>} : vector<8x128xbf16>, vector<128x128xbf16>, vector<8x128xf32> -> vector<8x128xf32>
    %c3_33 = arith.constant 3 : index
    %c0_34 = arith.constant 0 : index
    %c0_35 = arith.constant 0 : index
    %66 = vector.load %arg6[%c3_33, %c0_34, %c0_35] : memref<5x1x128xf32, #tpu.memory_space<vmem>>, vector<1x1x128xf32>
    %67 = vector.shape_cast %66 : vector<1x1x128xf32> to vector<1x128xf32>
    %68 = vector.broadcast %67 : vector<1x128xf32> to vector<8x128xf32>
    %69 = arith.addf %65, %68 : vector<8x128xf32>
    %70 = arith.negf %69 : vector<8x128xf32>
    %71 = math.exp %70 : vector<8x128xf32>
    %cst_36 = arith.constant 1.000000e+00 : f32
    %72 = vector.broadcast %cst_36 : f32 to vector<8x128xf32>
    %73 = arith.addf %72, %71 : vector<8x128xf32>
    %74 = arith.divf %72, %73 : vector<8x128xf32>
    %75 = arith.mulf %69, %74 : vector<8x128xf32>
    %76 = arith.addf %61, %75 : vector<8x128xf32>
    %77 = arith.truncf %76 : vector<8x128xf32> to vector<8x128xbf16>
    %c4 = arith.constant 4 : index
    %c0_37 = arith.constant 0 : index
    %c0_38 = arith.constant 0 : index
    %78 = vector.load %arg5[%c4, %c0_37, %c0_38] : memref<5x128x128xbf16, #tpu.memory_space<vmem>>, vector<1x128x128xbf16>
    %79 = vector.shape_cast %78 : vector<1x128x128xbf16> to vector<128x128xbf16>
    %cst_39 = arith.constant dense<0.000000e+00> : vector<8x128xf32>
    %80 = tpu.matmul %77, %79, %cst_39 {dimension_numbers = #tpu.dot_dimension_numbers<[1], [0], [0], [1], [0, 0, 1, 1], [], []>} : vector<8x128xbf16>, vector<128x128xbf16>, vector<8x128xf32> -> vector<8x128xf32>
    %c4_40 = arith.constant 4 : index
    %c0_41 = arith.constant 0 : index
    %c0_42 = arith.constant 0 : index
    %81 = vector.load %arg6[%c4_40, %c0_41, %c0_42] : memref<5x1x128xf32, #tpu.memory_space<vmem>>, vector<1x1x128xf32>
    %82 = vector.shape_cast %81 : vector<1x1x128xf32> to vector<1x128xf32>
    %83 = vector.broadcast %82 : vector<1x128xf32> to vector<8x128xf32>
    %84 = arith.addf %80, %83 : vector<8x128xf32>
    %85 = arith.negf %84 : vector<8x128xf32>
    %86 = math.exp %85 : vector<8x128xf32>
    %cst_43 = arith.constant 1.000000e+00 : f32
    %87 = vector.broadcast %cst_43 : f32 to vector<8x128xf32>
    %88 = arith.addf %87, %86 : vector<8x128xf32>
    %89 = arith.divf %87, %88 : vector<8x128xf32>
    %90 = arith.mulf %84, %89 : vector<8x128xf32>
    %91 = arith.addf %76, %90 : vector<8x128xf32>
    %92 = arith.truncf %91 : vector<8x128xf32> to vector<8x128xbf16>
    %c0_44 = arith.constant 0 : index
    %c0_45 = arith.constant 0 : index
    %93 = vector.load %arg7[%c0_44, %c0_45] : memref<128x128xbf16, #tpu.memory_space<vmem>>, vector<128x128xbf16>
    %cst_46 = arith.constant dense<0.000000e+00> : vector<8x128xf32>
    %94 = tpu.matmul %92, %93, %cst_46 {dimension_numbers = #tpu.dot_dimension_numbers<[1], [0], [0], [1], [0, 0, 1, 1], [], []>} : vector<8x128xbf16>, vector<128x128xbf16>, vector<8x128xf32> -> vector<8x128xf32>
    %c0_47 = arith.constant 0 : index
    %c0_48 = arith.constant 0 : index
    %95 = vector.load %arg8[%c0_47, %c0_48] : memref<1x128xf32, #tpu.memory_space<vmem>>, vector<1x128xf32>
    %96 = vector.broadcast %95 : vector<1x128xf32> to vector<8x128xf32>
    %97 = arith.addf %94, %96 : vector<8x128xf32>
    %98 = arith.addf %0, %97 : vector<8x128xf32>
    %99 = arith.negf %98 : vector<8x128xf32>
    %100 = math.exp %99 : vector<8x128xf32>
    %cst_49 = arith.constant 1.000000e+00 : f32
    %101 = vector.broadcast %cst_49 : f32 to vector<8x128xf32>
    %102 = arith.addf %101, %100 : vector<8x128xf32>
    %103 = arith.divf %101, %102 : vector<8x128xf32>
    %104 = arith.mulf %98, %103 : vector<8x128xf32>
    %105 = arith.truncf %104 : vector<8x128xf32> to vector<8x128xbf16>
    %c0_50 = arith.constant 0 : index
    %c0_51 = arith.constant 0 : index
    %106 = vector.load %arg9[%c0_50, %c0_51] : memref<128x128xbf16, #tpu.memory_space<vmem>>, vector<128x128xbf16>
    %cst_52 = arith.constant dense<0.000000e+00> : vector<8x128xf32>
    %107 = tpu.matmul %105, %106, %cst_52 {dimension_numbers = #tpu.dot_dimension_numbers<[1], [0], [0], [1], [0, 0, 1, 1], [], []>} : vector<8x128xbf16>, vector<128x128xbf16>, vector<8x128xf32> -> vector<8x128xf32>
    %c0_53 = arith.constant 0 : index
    %c0_54 = arith.constant 0 : index
    %108 = vector.load %arg10[%c0_53, %c0_54] : memref<1x128xf32, #tpu.memory_space<vmem>>, vector<1x128xf32>
    %109 = vector.broadcast %108 : vector<1x128xf32> to vector<8x128xf32>
    %110 = arith.addf %107, %109 : vector<8x128xf32>
    %cst_55 = arith.constant 1.000000e+01 : f32
    %111 = vector.broadcast %cst_55 : f32 to vector<8x1xf32>
    %112 = arith.mulf %3, %111 : vector<8x1xf32>
    %113 = arith.mulf %112, %112 : vector<8x1xf32>
    %cst_56 = arith.constant 2.500000e-01 : f32
    %114 = vector.broadcast %cst_56 : f32 to vector<8x1xf32>
    %115 = arith.addf %114, %113 : vector<8x1xf32>
    %116 = math.rsqrt %115 : vector<8x1xf32>
    %117 = arith.mulf %116, %116 : vector<8x1xf32>
    %cst_57 = arith.constant 2.500000e-01 : f32
    %118 = vector.broadcast %cst_57 : f32 to vector<8x1xf32>
    %119 = arith.mulf %118, %117 : vector<8x1xf32>
    %120 = math.absf %112 : vector<8x1xf32>
    %121 = arith.mulf %120, %116 : vector<8x1xf32>
    %cst_58 = arith.constant 5.000000e-01 : f32
    %122 = vector.broadcast %cst_58 : f32 to vector<8x1xf32>
    %123 = arith.mulf %122, %121 : vector<8x1xf32>
    %124 = vector.broadcast %119 : vector<8x1xf32> to vector<8x128xf32>
    %125 = arith.mulf %0, %124 : vector<8x128xf32>
    %126 = vector.broadcast %123 : vector<8x1xf32> to vector<8x128xf32>
    %127 = arith.mulf %110, %126 : vector<8x128xf32>
    %128 = arith.addf %125, %127 : vector<8x128xf32>
    %c0_59 = arith.constant 0 : index
    %c0_60 = arith.constant 0 : index
    %129 = vector.load %arg11[%c0_59, %c0_60] : memref<8x128xf32, #tpu.memory_space<vmem>>, vector<8x128xf32>
    tpu.vector_store %arg11[%c0_59, %c0_60], %128 {strides = array<i32>} : memref<8x128xf32, #tpu.memory_space<vmem>>, vector<8x128xf32>,
    return
  }
  func.func @transform_0(%arg0: i32) -> (i32, i32) {
    %c0_i32 = arith.constant 0 : i32
    %c0_i32_0 = arith.constant 0 : i32
    return %arg0, %c0_i32 : i32, i32
  }
  func.func @transform_1(%arg0: i32) -> (i32, i32) {
    %c0_i32 = arith.constant 0 : i32
    %c0_i32_0 = arith.constant 0 : i32
    return %arg0, %c0_i32 : i32, i32
  }
  func.func @transform_2(%arg0: i32) -> (i32, i32) {
    %c0_i32 = arith.constant 0 : i32
    %c0_i32_0 = arith.constant 0 : i32
    %c0_i32_1 = arith.constant 0 : i32
    return %c0_i32, %c0_i32_0 : i32, i32
  }
  func.func @transform_3(%arg0: i32) -> (i32, i32) {
    %c0_i32 = arith.constant 0 : i32
    %c0_i32_0 = arith.constant 0 : i32
    %c0_i32_1 = arith.constant 0 : i32
    return %c0_i32, %c0_i32_0 : i32, i32
  }
  func.func @transform_4(%arg0: i32) -> (i32, i32, i32) {
    %c0_i32 = arith.constant 0 : i32
    %c0_i32_0 = arith.constant 0 : i32
    %c0_i32_1 = arith.constant 0 : i32
    %c0_i32_2 = arith.constant 0 : i32
    return %c0_i32, %c0_i32_0, %c0_i32_1 : i32, i32, i32
  }
  func.func @transform_5(%arg0: i32) -> (i32, i32, i32) {
    %c0_i32 = arith.constant 0 : i32
    %c0_i32_0 = arith.constant 0 : i32
    %c0_i32_1 = arith.constant 0 : i32
    %c0_i32_2 = arith.constant 0 : i32
    return %c0_i32, %c0_i32_0, %c0_i32_1 : i32, i32, i32
  }
  func.func @transform_6(%arg0: i32) -> (i32, i32) {
    %c0_i32 = arith.constant 0 : i32
    %c0_i32_0 = arith.constant 0 : i32
    %c0_i32_1 = arith.constant 0 : i32
    return %c0_i32, %c0_i32_0 : i32, i32
  }
  func.func @transform_7(%arg0: i32) -> (i32, i32) {
    %c0_i32 = arith.constant 0 : i32
    %c0_i32_0 = arith.constant 0 : i32
    %c0_i32_1 = arith.constant 0 : i32
    return %c0_i32, %c0_i32_0 : i32, i32
  }
  func.func @transform_8(%arg0: i32) -> (i32, i32) {
    %c0_i32 = arith.constant 0 : i32
    %c0_i32_0 = arith.constant 0 : i32
    %c0_i32_1 = arith.constant 0 : i32
    return %c0_i32, %c0_i32_0 : i32, i32
  }
  func.func @transform_9(%arg0: i32) -> (i32, i32) {
    %c0_i32 = arith.constant 0 : i32
    %c0_i32_0 = arith.constant 0 : i32
    %c0_i32_1 = arith.constant 0 : i32
    return %c0_i32, %c0_i32_0 : i32, i32
  }
  func.func @transform_10(%arg0: i32) -> (i32, i32) {
    %c0_i32 = arith.constant 0 : i32
    %c0_i32_0 = arith.constant 0 : i32
    return %arg0, %c0_i32 : i32, i32
  }
}

module attributes {stable_mosaic.version = 11 : i64} {
  func.func @_no3_kernel(%arg0: i32, %arg1: memref<8x128xf32, #tpu.memory_space<vmem>>, %arg2: memref<8x1xf32, #tpu.memory_space<vmem>>, %arg3: memref<1x128xf32, #tpu.memory_space<vmem>>, %arg4: memref<1x128xf32, #tpu.memory_space<vmem>>, %arg5: memref<5x128x128xbf16, #tpu.memory_space<vmem>>, %arg6: memref<5x1x128xf32, #tpu.memory_space<vmem>>, %arg7: memref<128x128xbf16, #tpu.memory_space<vmem>>, %arg8: memref<1x128xf32, #tpu.memory_space<vmem>>, %arg9: memref<128x128xbf16, #tpu.memory_space<vmem>>, %arg10: memref<1x128xf32, #tpu.memory_space<vmem>>, %arg11: memref<8x128xf32, #tpu.memory_space<vmem>>) attributes {dimension_semantics = [#tpu.dimension_semantics<parallel>], iteration_bounds = array<i64: 1>, scalar_prefetch = 0 : i64, scratch_operands = 0 : i64, tpu.core_type = #tpu.core_type<tc>, window_params = [{transform_indices = @transform_0, window_bounds = array<i64: 8, 128>}, {transform_indices = @transform_1, window_bounds = array<i64: 8, 1>}, {pipeline_mode = #tpu.pipeline_mode<synchronous>, transform_indices = @transform_2, window_bounds = array<i64: 1, 128>}, {pipeline_mode = #tpu.pipeline_mode<synchronous>, transform_indices = @transform_3, window_bounds = array<i64: 1, 128>}, {pipeline_mode = #tpu.pipeline_mode<synchronous>, transform_indices = @transform_4, window_bounds = array<i64: 5, 128, 128>}, {pipeline_mode = #tpu.pipeline_mode<synchronous>, transform_indices = @transform_5, window_bounds = array<i64: 5, 1, 128>}, {pipeline_mode = #tpu.pipeline_mode<synchronous>, transform_indices = @transform_6, window_bounds = array<i64: 128, 128>}, {pipeline_mode = #tpu.pipeline_mode<synchronous>, transform_indices = @transform_7, window_bounds = array<i64: 1, 128>}, {pipeline_mode = #tpu.pipeline_mode<synchronous>, transform_indices = @transform_8, window_bounds = array<i64: 128, 128>}, {pipeline_mode = #tpu.pipeline_mode<synchronous>, transform_indices = @transform_9, window_bounds = array<i64: 1, 128>}, {transform_indices = @transform_10, window_bounds = array<i64: 8, 128>}]} {
    %c0 = arith.constant 0 : index
    %c0_0 = arith.constant 0 : index
    %0 = vector.load %arg1[%c0, %c0_0] : memref<8x128xf32, #tpu.memory_space<vmem>>, vector<8x128xf32>
    %c0_1 = arith.constant 0 : index
    %c0_2 = arith.constant 0 : index
    %1 = vector.load %arg2[%c0_1, %c0_2] : memref<8x1xf32, #tpu.memory_space<vmem>>, vector<8x1xf32>
    %cst = arith.constant 1.000000e+00 : f32
    %2 = vector.broadcast %cst : f32 to vector<8x1xf32>
    %3 = arith.mulf %1, %2 : vector<8x1xf32>
    %c0_3 = arith.constant 0 : index
    %c0_4 = arith.constant 0 : index
    %4 = vector.load %arg3[%c0_3, %c0_4] : memref<1x128xf32, #tpu.memory_space<vmem>>, vector<1x128xf32>
    %5 = vector.broadcast %3 : vector<8x1xf32> to vector<8x128xf32>
    %6 = vector.broadcast %4 : vector<1x128xf32> to vector<8x128xf32>
    %7 = arith.mulf %5, %6 : vector<8x128xf32>
    %c0_5 = arith.constant 0 : index
    %c0_6 = arith.constant 0 : index
    %8 = vector.load %arg4[%c0_5, %c0_6] : memref<1x128xf32, #tpu.memory_space<vmem>>, vector<1x128xf32>
    %9 = vector.broadcast %8 : vector<1x128xf32> to vector<8x128xf32>
    %10 = arith.addf %7, %9 : vector<8x128xf32>
    %11 = arith.negf %10 : vector<8x128xf32>
    %12 = math.exp %11 : vector<8x128xf32>
    %cst_7 = arith.constant 1.000000e+00 : f32
    %13 = vector.broadcast %cst_7 : f32 to vector<8x128xf32>
    %14 = arith.addf %13, %12 : vector<8x128xf32>
    %15 = arith.divf %13, %14 : vector<8x128xf32>
    %16 = arith.mulf %10, %15 : vector<8x128xf32>
    %17 = arith.truncf %16 : vector<8x128xf32> to vector<8x128xbf16>
    %c0_8 = arith.constant 0 : index
    %c0_9 = arith.constant 0 : index
    %c0_10 = arith.constant 0 : index
    %18 = vector.load %arg5[%c0_8, %c0_9, %c0_10] : memref<5x128x128xbf16, #tpu.memory_space<vmem>>, vector<1x128x128xbf16>
    %19 = vector.shape_cast %18 : vector<1x128x128xbf16> to vector<128x128xbf16>
    %cst_11 = arith.constant dense<0.000000e+00> : vector<8x128xf32>
    %20 = tpu.matmul %17, %19, %cst_11 {dimension_numbers = #tpu.dot_dimension_numbers<[1], [0], [0], [1], [0, 0, 1, 1], [], []>} : vector<8x128xbf16>, vector<128x128xbf16>, vector<8x128xf32> -> vector<8x128xf32>
    %c0_12 = arith.constant 0 : index
    %c0_13 = arith.constant 0 : index
    %c0_14 = arith.constant 0 : index
    %21 = vector.load %arg6[%c0_12, %c0_13, %c0_14] : memref<5x1x128xf32, #tpu.memory_space<vmem>>, vector<1x1x128xf32>
    %22 = vector.shape_cast %21 : vector<1x1x128xf32> to vector<1x128xf32>
    %23 = vector.broadcast %22 : vector<1x128xf32> to vector<8x128xf32>
    %24 = arith.addf %20, %23 : vector<8x128xf32>
    %25 = arith.negf %24 : vector<8x128xf32>
    %26 = math.exp %25 : vector<8x128xf32>
    %cst_15 = arith.constant 1.000000e+00 : f32
    %27 = vector.broadcast %cst_15 : f32 to vector<8x128xf32>
    %28 = arith.addf %27, %26 : vector<8x128xf32>
    %29 = arith.divf %27, %28 : vector<8x128xf32>
    %30 = arith.mulf %24, %29 : vector<8x128xf32>
    %31 = arith.addf %16, %30 : vector<8x128xf32>
    %32 = arith.truncf %31 : vector<8x128xf32> to vector<8x128xbf16>
    %c1 = arith.constant 1 : index
    %c0_16 = arith.constant 0 : index
    %c0_17 = arith.constant 0 : index
    %33 = vector.load %arg5[%c1, %c0_16, %c0_17] : memref<5x128x128xbf16, #tpu.memory_space<vmem>>, vector<1x128x128xbf16>
    %34 = vector.shape_cast %33 : vector<1x128x128xbf16> to vector<128x128xbf16>
    %cst_18 = arith.constant dense<0.000000e+00> : vector<8x128xf32>
    %35 = tpu.matmul %32, %34, %cst_18 {dimension_numbers = #tpu.dot_dimension_numbers<[1], [0], [0], [1], [0, 0, 1, 1], [], []>} : vector<8x128xbf16>, vector<128x128xbf16>, vector<8x128xf32> -> vector<8x128xf32>
    %c1_19 = arith.constant 1 : index
    %c0_20 = arith.constant 0 : index
    %c0_21 = arith.constant 0 : index
    %36 = vector.load %arg6[%c1_19, %c0_20, %c0_21] : memref<5x1x128xf32, #tpu.memory_space<vmem>>, vector<1x1x128xf32>
    %37 = vector.shape_cast %36 : vector<1x1x128xf32> to vector<1x128xf32>
    %38 = vector.broadcast %37 : vector<1x128xf32> to vector<8x128xf32>
    %39 = arith.addf %35, %38 : vector<8x128xf32>
    %40 = arith.negf %39 : vector<8x128xf32>
    %41 = math.exp %40 : vector<8x128xf32>
    %cst_22 = arith.constant 1.000000e+00 : f32
    %42 = vector.broadcast %cst_22 : f32 to vector<8x128xf32>
    %43 = arith.addf %42, %41 : vector<8x128xf32>
    %44 = arith.divf %42, %43 : vector<8x128xf32>
    %45 = arith.mulf %39, %44 : vector<8x128xf32>
    %46 = arith.addf %31, %45 : vector<8x128xf32>
    %47 = arith.truncf %46 : vector<8x128xf32> to vector<8x128xbf16>
    %c2 = arith.constant 2 : index
    %c0_23 = arith.constant 0 : index
    %c0_24 = arith.constant 0 : index
    %48 = vector.load %arg5[%c2, %c0_23, %c0_24] : memref<5x128x128xbf16, #tpu.memory_space<vmem>>, vector<1x128x128xbf16>
    %49 = vector.shape_cast %48 : vector<1x128x128xbf16> to vector<128x128xbf16>
    %cst_25 = arith.constant dense<0.000000e+00> : vector<8x128xf32>
    %50 = tpu.matmul %47, %49, %cst_25 {dimension_numbers = #tpu.dot_dimension_numbers<[1], [0], [0], [1], [0, 0, 1, 1], [], []>} : vector<8x128xbf16>, vector<128x128xbf16>, vector<8x128xf32> -> vector<8x128xf32>
    %c2_26 = arith.constant 2 : index
    %c0_27 = arith.constant 0 : index
    %c0_28 = arith.constant 0 : index
    %51 = vector.load %arg6[%c2_26, %c0_27, %c0_28] : memref<5x1x128xf32, #tpu.memory_space<vmem>>, vector<1x1x128xf32>
    %52 = vector.shape_cast %51 : vector<1x1x128xf32> to vector<1x128xf32>
    %53 = vector.broadcast %52 : vector<1x128xf32> to vector<8x128xf32>
    %54 = arith.addf %50, %53 : vector<8x128xf32>
    %55 = arith.negf %54 : vector<8x128xf32>
    %56 = math.exp %55 : vector<8x128xf32>
    %cst_29 = arith.constant 1.000000e+00 : f32
    %57 = vector.broadcast %cst_29 : f32 to vector<8x128xf32>
    %58 = arith.addf %57, %56 : vector<8x128xf32>
    %59 = arith.divf %57, %58 : vector<8x128xf32>
    %60 = arith.mulf %54, %59 : vector<8x128xf32>
    %61 = arith.addf %46, %60 : vector<8x128xf32>
    %62 = arith.truncf %61 : vector<8x128xf32> to vector<8x128xbf16>
    %c3 = arith.constant 3 : index
    %c0_30 = arith.constant 0 : index
    %c0_31 = arith.constant 0 : index
    %63 = vector.load %arg5[%c3, %c0_30, %c0_31] : memref<5x128x128xbf16, #tpu.memory_space<vmem>>, vector<1x128x128xbf16>
    %64 = vector.shape_cast %63 : vector<1x128x128xbf16> to vector<128x128xbf16>
    %cst_32 = arith.constant dense<0.000000e+00> : vector<8x128xf32>
    %65 = tpu.matmul %62, %64, %cst_32 {dimension_numbers = #tpu.dot_dimension_numbers<[1], [0], [0], [1], [0, 0, 1, 1], [], []>} : vector<8x128xbf16>, vector<128x128xbf16>, vector<8x128xf32> -> vector<8x128xf32>
    %c3_33 = arith.constant 3 : index
    %c0_34 = arith.constant 0 : index
    %c0_35 = arith.constant 0 : index
    %66 = vector.load %arg6[%c3_33, %c0_34, %c0_35] : memref<5x1x128xf32, #tpu.memory_space<vmem>>, vector<1x1x128xf32>
    %67 = vector.shape_cast %66 : vector<1x1x128xf32> to vector<1x128xf32>
    %68 = vector.broadcast %67 : vector<1x128xf32> to vector<8x128xf32>
    %69 = arith.addf %65, %68 : vector<8x128xf32>
    %70 = arith.negf %69 : vector<8x128xf32>
    %71 = math.exp %70 : vector<8x128xf32>
    %cst_36 = arith.constant 1.000000e+00 : f32
    %72 = vector.broadcast %cst_36 : f32 to vector<8x128xf32>
    %73 = arith.addf %72, %71 : vector<8x128xf32>
    %74 = arith.divf %72, %73 : vector<8x128xf32>
    %75 = arith.mulf %69, %74 : vector<8x128xf32>
    %76 = arith.addf %61, %75 : vector<8x128xf32>
    %77 = arith.truncf %76 : vector<8x128xf32> to vector<8x128xbf16>
    %c4 = arith.constant 4 : index
    %c0_37 = arith.constant 0 : index
    %c0_38 = arith.constant 0 : index
    %78 = vector.load %arg5[%c4, %c0_37, %c0_38] : memref<5x128x128xbf16, #tpu.memory_space<vmem>>, vector<1x128x128xbf16>
    %79 = vector.shape_cast %78 : vector<1x128x128xbf16> to vector<128x128xbf16>
    %cst_39 = arith.constant dense<0.000000e+00> : vector<8x128xf32>
    %80 = tpu.matmul %77, %79, %cst_39 {dimension_numbers = #tpu.dot_dimension_numbers<[1], [0], [0], [1], [0, 0, 1, 1], [], []>} : vector<8x128xbf16>, vector<128x128xbf16>, vector<8x128xf32> -> vector<8x128xf32>
    %c4_40 = arith.constant 4 : index
    %c0_41 = arith.constant 0 : index
    %c0_42 = arith.constant 0 : index
    %81 = vector.load %arg6[%c4_40, %c0_41, %c0_42] : memref<5x1x128xf32, #tpu.memory_space<vmem>>, vector<1x1x128xf32>
    %82 = vector.shape_cast %81 : vector<1x1x128xf32> to vector<1x128xf32>
    %83 = vector.broadcast %82 : vector<1x128xf32> to vector<8x128xf32>
    %84 = arith.addf %80, %83 : vector<8x128xf32>
    %85 = arith.negf %84 : vector<8x128xf32>
    %86 = math.exp %85 : vector<8x128xf32>
    %cst_43 = arith.constant 1.000000e+00 : f32
    %87 = vector.broadcast %cst_43 : f32 to vector<8x128xf32>
    %88 = arith.addf %87, %86 : vector<8x128xf32>
    %89 = arith.divf %87, %88 : vector<8x128xf32>
    %90 = arith.mulf %84, %89 : vector<8x128xf32>
    %91 = arith.addf %76, %90 : vector<8x128xf32>
    %92 = arith.truncf %91 : vector<8x128xf32> to vector<8x128xbf16>
    %c0_44 = arith.constant 0 : index
    %c0_45 = arith.constant 0 : index
    %93 = vector.load %arg7[%c0_44, %c0_45] : memref<128x128xbf16, #tpu.memory_space<vmem>>, vector<128x128xbf16>
    %cst_46 = arith.constant dense<0.000000e+00> : vector<8x128xf32>
    %94 = tpu.matmul %92, %93, %cst_46 {dimension_numbers = #tpu.dot_dimension_numbers<[1], [0], [0], [1], [0, 0, 1, 1], [], []>} : vector<8x128xbf16>, vector<128x128xbf16>, vector<8x128xf32> -> vector<8x128xf32>
    %c0_47 = arith.constant 0 : index
    %c0_48 = arith.constant 0 : index
    %95 = vector.load %arg8[%c0_47, %c0_48] : memref<1x128xf32, #tpu.memory_space<vmem>>, vector<1x128xf32>
    %96 = vector.broadcast %95 : vector<1x128xf32> to vector<8x128xf32>
    %97 = arith.addf %94, %96 : vector<8x128xf32>
    %98 = arith.addf %0, %97 : vector<8x128xf32>
    %99 = arith.negf %98 : vector<8x128xf32>
    %100 = math.exp %99 : vector<8x128xf32>
    %cst_49 = arith.constant 1.000000e+00 : f32
    %101 = vector.broadcast %cst_49 : f32 to vector<8x128xf32>
    %102 = arith.addf %101, %100 : vector<8x128xf32>
    %103 = arith.divf %101, %102 : vector<8x128xf32>
    %104 = arith.mulf %98, %103 : vector<8x128xf32>
    %105 = arith.truncf %104 : vector<8x128xf32> to vector<8x128xbf16>
    %c0_50 = arith.constant 0 : index
    %c0_51 = arith.constant 0 : index
    %106 = vector.load %arg9[%c0_50, %c0_51] : memref<128x128xbf16, #tpu.memory_space<vmem>>, vector<128x128xbf16>
    %cst_52 = arith.constant dense<0.000000e+00> : vector<8x128xf32>
    %107 = tpu.matmul %105, %106, %cst_52 {dimension_numbers = #tpu.dot_dimension_numbers<[1], [0], [0], [1], [0, 0, 1, 1], [], []>} : vector<8x128xbf16>, vector<128x128xbf16>, vector<8x128xf32> -> vector<8x128xf32>
    %c0_53 = arith.constant 0 : index
    %c0_54 = arith.constant 0 : index
    %108 = vector.load %arg10[%c0_53, %c0_54] : memref<1x128xf32, #tpu.memory_space<vmem>>, vector<1x128xf32>
    %109 = vector.broadcast %108 : vector<1x128xf32> to vector<8x128xf32>
    %110 = arith.addf %107, %109 : vector<8x128xf32>
    %cst_55 = arith.constant 1.000000e+01 : f32
    %111 = vector.broadcast %cst_55 : f32 to vector<8x1xf32>
    %112 = arith.mulf %3, %111 : vector<8x1xf32>
    %113 = arith.mulf %112, %112 : vector<8x1xf32>
    %cst_56 = arith.constant 2.500000e-01 : f32
    %114 = vector.broadcast %cst_56 : f32 to vector<8x1xf32>
    %115 = arith.addf %114, %113 : vector<8x1xf32>
    %116 = math.rsqrt %115 : vector<8x1xf32>
    %117 = arith.mulf %116, %116 : vector<8x1xf32>
    %cst_57 = arith.constant 2.500000e-01 : f32
    %118 = vector.broadcast %cst_57 : f32 to vector<8x1xf32>
    %119 = arith.mulf %118, %117 : vector<8x1xf32>
    %120 = math.absf %112 : vector<8x1xf32>
    %121 = arith.mulf %120, %116 : vector<8x1xf32>
    %cst_58 = arith.constant 5.000000e-01 : f32
    %122 = vector.broadcast %cst_58 : f32 to vector<8x1xf32>
    %123 = arith.mulf %122, %121 : vector<8x1xf32>
    %124 = vector.broadcast %119 : vector<8x1xf32> to vector<8x128xf32>
    %125 = arith.mulf %0, %124 : vector<8x128xf32>
    %126 = vector.broadcast %123 : vector<8x1xf32> to vector<8x128xf32>
    %127 = arith.mulf %110, %126 : vector<8x128xf32>
    %128 = arith.addf %125, %127 : vector<8x128xf32>
    %c0_59 = arith.constant 0 : index
    %c0_60 = arith.constant 0 : index
    %129 = vector.load %arg11[%c0_59, %c0_60] : memref<8x128xf32, #tpu.memory_space<vmem>>, vector<8x128xf32>
    tpu.vector_store %arg11[%c0_59, %c0_60], %128 {strides = array<i32>} : memref<8x128xf32, #tpu.memory_space<vmem>>, vector<8x128xf32>,
    return
  }
  func.func @transform_0(%arg0: i32) -> (i32, i32) {
    %c0_i32 = arith.constant 0 : i32
    %c0_i32_0 = arith.constant 0 : i32
    return %arg0, %c0_i32 : i32, i32
  }
  func.func @transform_1(%arg0: i32) -> (i32, i32) {
    %c0_i32 = arith.constant 0 : i32
    %c0_i32_0 = arith.constant 0 : i32
    return %arg0, %c0_i32 : i32, i32
  }
  func.func @transform_2(%arg0: i32) -> (i32, i32) {
    %c0_i32 = arith.constant 0 : i32
    %c0_i32_0 = arith.constant 0 : i32
    %c0_i32_1 = arith.constant 0 : i32
    return %c0_i32, %c0_i32_0 : i32, i32
  }
  func.func @transform_3(%arg0: i32) -> (i32, i32) {
    %c0_i32 = arith.constant 0 : i32
    %c0_i32_0 = arith.constant 0 : i32
    %c0_i32_1 = arith.constant 0 : i32
    return %c0_i32, %c0_i32_0 : i32, i32
  }
  func.func @transform_4(%arg0: i32) -> (i32, i32, i32) {
    %c0_i32 = arith.constant 0 : i32
    %c0_i32_0 = arith.constant 0 : i32
    %c0_i32_1 = arith.constant 0 : i32
    %c0_i32_2 = arith.constant 0 : i32
    return %c0_i32, %c0_i32_0, %c0_i32_1 : i32, i32, i32
  }
  func.func @transform_5(%arg0: i32) -> (i32, i32, i32) {
    %c0_i32 = arith.constant 0 : i32
    %c0_i32_0 = arith.constant 0 : i32
    %c0_i32_1 = arith.constant 0 : i32
    %c0_i32_2 = arith.constant 0 : i32
    return %c0_i32, %c0_i32_0, %c0_i32_1 : i32, i32, i32
  }
  func.func @transform_6(%arg0: i32) -> (i32, i32) {
    %c0_i32 = arith.constant 0 : i32
    %c0_i32_0 = arith.constant 0 : i32
    %c0_i32_1 = arith.constant 0 : i32
    return %c0_i32, %c0_i32_0 : i32, i32
  }
  func.func @transform_7(%arg0: i32) -> (i32, i32) {
    %c0_i32 = arith.constant 0 : i32
    %c0_i32_0 = arith.constant 0 : i32
    %c0_i32_1 = arith.constant 0 : i32
    return %c0_i32, %c0_i32_0 : i32, i32
  }
  func.func @transform_8(%arg0: i32) -> (i32, i32) {
    %c0_i32 = arith.constant 0 : i32
    %c0_i32_0 = arith.constant 0 : i32
    %c0_i32_1 = arith.constant 0 : i32
    return %c0_i32, %c0_i32_0 : i32, i32
  }
  func.func @transform_9(%arg0: i32) -> (i32, i32) {
    %c0_i32 = arith.constant 0 : i32
    %c0_i32_0 = arith.constant 0 : i32
    %c0_i32_1 = arith.constant 0 : i32
    return %c0_i32, %c0_i32_0 : i32, i32
  }
  func.func @transform_10(%arg0: i32) -> (i32, i32) {
    %c0_i32 = arith.constant 0 : i32
    %c0_i32_0 = arith.constant 0 : i32
    return %arg0, %c0_i32 : i32, i32
  }
}

</mosaic_0001>

<llo_original>
// kernel: tpu_custom_call.1
$region0: #{tpu_custom_call.1}
  #allocation0 [shape = 'u32[]', space=smem, size = 0x4, offset = 0x4, fixed_abs, tag = 'smem constant byte address 0x4 - core index']
  #allocation1 [shape = 'u32[144,128]{1,0:T(1,128)}', space=vmem, size = 0x12000, scoped, tag = 'internal scratch']
  %s0 = inlined_call_operand.vmem [shape: f32[8,128], index: 0, kind: input, shape index: {}]
  %s1 = inlined_call_operand.vmem [shape: f32[8,1], index: 1, kind: input, shape index: {}]
  %s2 = inlined_call_operand.vmem [shape: f32[1,128], index: 2, kind: input, shape index: {}]
  %s3 = inlined_call_operand.vmem [shape: f32[1,128], index: 3, kind: input, shape index: {}]
  %s4 = inlined_call_operand.hbm [shape: bf16[5,128,128], index: 4, kind: input, shape index: {}]
  %s5 = inlined_call_operand.vmem [shape: f32[5,1,128], index: 5, kind: input, shape index: {}]
  %s6 = inlined_call_operand.hbm [shape: bf16[128,128], index: 6, kind: input, shape index: {}]
  %s7 = inlined_call_operand.vmem [shape: f32[1,128], index: 7, kind: input, shape index: {}]
  %s8 = inlined_call_operand.hbm [shape: bf16[128,128], index: 8, kind: input, shape index: {}]
  %s9 = inlined_call_operand.vmem [shape: f32[1,128], index: 9, kind: input, shape index: {}]
  %s10 = inlined_call_operand.hbm [shape: f32[8,128], index: 10, kind: output, shape index: {}]
  %s11 = sld [smem:[#allocation0]]
  $region62: #{tpu_custom_call.1} parent=0
    _
  %s13 = ssub.s32 1, %s11
  %s14 = scalar_select 0, %s13, %s11
  $region1: #{tpu_custom_call.1} parent=0
    #allocation2 [shape = 'u8[163840]{0}', space=vmem, size = 0x28000, scoped, tag = 'input window, operand 4, single buffered']
    #allocation3 [shape = 's32[1]{0}', space=sflag, size = 0x4, scoped, tag = 'scoped memory for tpu_custom_call.1']
    #allocation4 [shape = 's32[1]{0}', space=sflag, size = 0x4, scoped, tag = 'scoped memory for tpu_custom_call.1']
    #allocation5 [shape = 'u8[32768]{0}', space=vmem, size = 0x8000, scoped, tag = 'input window, operand 6, single buffered']
    #allocation6 [shape = 's32[1]{0}', space=sflag, size = 0x4, scoped, tag = 'scoped memory for tpu_custom_call.1']
    #allocation7 [shape = 'u8[32768]{0}', space=vmem, size = 0x8000, scoped, tag = 'input window, operand 8, single buffered']
    #allocation8 [shape = 'u8[4096]{0}', space=vmem, size = 0x1000, scoped, tag = 'output window, operand 0, single buffered']
    %15 = vsyncpa [#allocation3], 0
    %16 = vsyncpa [#allocation6], 0
    %17 = vsyncpa [#allocation4], 0
    // Predicated region
    $region2: #{tpu_custom_call.1} parent=1 // pred_check
      _
    $region3: #{tpu_custom_call.1} parent=1 // pred_check_branch
      %19 = sbr.rel (0) target = $region5
    $region4: #{tpu_custom_call.1} parent=1 // pred_region
      _
    $region5: #{tpu_custom_call.1} parent=1 // pred_fallthru
      _
    // Predicated region
    $region6: #{tpu_custom_call.1} parent=1 // pred_check
      _
    $region7: #{tpu_custom_call.1} parent=1 // pred_check_branch
      %21 = sbr.rel (0) target = $region9
    $region8: #{tpu_custom_call.1} parent=1 // pred_region
      _
    $region9: #{tpu_custom_call.1} parent=1 // pred_fallthru
      _
    // Predicated region
    $region10: #{tpu_custom_call.1} parent=1 // pred_check
      _
    $region11: #{tpu_custom_call.1} parent=1 // pred_check_branch
      %23 = sbr.rel (0) target = $region13
    $region12: #{tpu_custom_call.1} parent=1 // pred_region
      _
    $region13: #{tpu_custom_call.1} parent=1 // pred_fallthru
      _
    // Predicated region
    $region14: #{tpu_custom_call.1} parent=1 // pred_check
      _
    $region15: #{tpu_custom_call.1} parent=1 // pred_check_branch
      %25 = sbr.rel (0) target = $region17
    $region16: #{tpu_custom_call.1} parent=1 // pred_region
      _
    $region17: #{tpu_custom_call.1} parent=1 // pred_fallthru
      _
    // Predicated region
    $region18: #{tpu_custom_call.1} parent=1 // pred_check
      _
    $region19: #{tpu_custom_call.1} parent=1 // pred_check_branch
      %27 = sbr.rel (0) target = $region21
    $region20: #{tpu_custom_call.1} parent=1 // pred_region
      %s29 = ssub.s32 5120, 5120
      %30 = vsyncadd [#allocation3], %s29
      %s31 = sshll.u32 [#allocation2], 4
      %s32 = int_to_ptr.vmem [resolvable:$true] %s31
      %37 = dma.hbm_to_vmem [thread:$0]  %s4, 5120, %s32, [#allocation3], 64, 64, 4
    $region21: #{tpu_custom_call.1} parent=1 // pred_fallthru
      _
    // Predicated region
    $region22: #{tpu_custom_call.1} parent=1 // pred_check
      _
    $region23: #{tpu_custom_call.1} parent=1 // pred_check_branch
      %39 = sbr.rel (0) target = $region25
    $region24: #{tpu_custom_call.1} parent=1 // pred_region
      _
    $region25: #{tpu_custom_call.1} parent=1 // pred_fallthru
      _
    // Predicated region
    $region26: #{tpu_custom_call.1} parent=1 // pred_check
      _
    $region27: #{tpu_custom_call.1} parent=1 // pred_check_branch
      %41 = sbr.rel (0) target = $region29
    $region28: #{tpu_custom_call.1} parent=1 // pred_region
      %s43 = ssub.s32 1024, 1024
      %44 = vsyncadd [#allocation6], %s43
      %s45 = sshll.u32 [#allocation5], 4
      %s46 = int_to_ptr.vmem [resolvable:$true] %s45
      %51 = dma.hbm_to_vmem [thread:$0]  %s6, 1024, %s46, [#allocation6], 64, 64, 4
    $region29: #{tpu_custom_call.1} parent=1 // pred_fallthru
      _
    // Predicated region
    $region30: #{tpu_custom_call.1} parent=1 // pred_check
      _
    $region31: #{tpu_custom_call.1} parent=1 // pred_check_branch
      %53 = sbr.rel (0) target = $region33
    $region32: #{tpu_custom_call.1} parent=1 // pred_region
      _
    $region33: #{tpu_custom_call.1} parent=1 // pred_fallthru
      _
    // Predicated region
    $region34: #{tpu_custom_call.1} parent=1 // pred_check
      _
    $region35: #{tpu_custom_call.1} parent=1 // pred_check_branch
      %55 = sbr.rel (0) target = $region37
    $region36: #{tpu_custom_call.1} parent=1 // pred_region
      %s57 = ssub.s32 1024, 1024
      %58 = vsyncadd [#allocation6], %s57
      %s59 = sshll.u32 [#allocation7], 4
      %s60 = int_to_ptr.vmem [resolvable:$true] %s59
      %65 = dma.hbm_to_vmem [thread:$0]  %s8, 1024, %s60, [#allocation6], 64, 64, 4
    $region37: #{tpu_custom_call.1} parent=1 // pred_fallthru
      _
    // Predicated region
    $region38: #{tpu_custom_call.1} parent=1 // pred_check
      _
    $region39: #{tpu_custom_call.1} parent=1 // pred_check_branch
      %67 = sbr.rel (0) target = $region41
    $region40: #{tpu_custom_call.1} parent=1 // pred_region
      _
    $region41: #{tpu_custom_call.1} parent=1 // pred_fallthru
      _
    // Predicated region
    $region42: #{tpu_custom_call.1} parent=1 // pred_check
      _
    $region43: #{tpu_custom_call.1} parent=1 // pred_check_branch
      %69 = sbr.rel (0) target = $region45
    $region44: #{tpu_custom_call.1} parent=1 // pred_region
      %70 = dma.done [#allocation3], 5120
    $region45: #{tpu_custom_call.1} parent=1 // pred_fallthru
      _
    // Predicated region
    $region46: #{tpu_custom_call.1} parent=1 // pred_check
      _
    $region47: #{tpu_custom_call.1} parent=1 // pred_check_branch
      %72 = sbr.rel (0) target = $region49
    $region48: #{tpu_custom_call.1} parent=1 // pred_region
      %73 = dma.done [#allocation6], 1024
    $region49: #{tpu_custom_call.1} parent=1 // pred_fallthru
      _
    // Predicated region
    $region50: #{tpu_custom_call.1} parent=1 // pred_check
      _
    $region51: #{tpu_custom_call.1} parent=1 // pred_check_branch
      %75 = sbr.rel (0) target = $region53
    $region52: #{tpu_custom_call.1} parent=1 // pred_region
      %76 = dma.done [#allocation6], 1024
    $region53: #{tpu_custom_call.1} parent=1 // pred_fallthru
      _
    %v78 = vld [vmem:[%s0] sm:$0xff]
    %v79 = vld [vmem:[%s1] sm:$0xff]
    %v80 = vld [vmem:[%s2] sm:$0x1]
    %82 = vset.pattern.permute.xlu0 0
    %83 = vperm.xlu0 %82, %v79
    %v84 = vpop.permute.xlu0 %83
    %v87 = vlaneseq
    %v88 = vshrl.u32 %v87, 7
    %v89 = vsub.s32 0, %v88
    %v90 = vrot.slane %v80, %v89
    %v92 = vmul.f32 %v84, %v90
    %v93 = vld [vmem:[%s3] sm:$0x1]
    %v95 = vlaneseq
    %v96 = vshrl.u32 %v95, 7
    %v97 = vsub.s32 0, %v96
    %v98 = vrot.slane %v93, %v97
    %v100 = vadd.f32 %v92, %v98
    %v101 = vxor.u32 %v100, 2147483648
    %v102 = vmul.f32 %v101, 1.442695
    %v103 = vpow.pop %v102
    %v104 = vadd.f32 %v103, 1.0
    %v105 = vrcp.pop %v104
    %v106 = vmul.f32 1.0, %v105
    %v107 = vmul.f32 %v100, %v106
    %v108 = vpack.c.bf16 %v107, %v107
    %v109 = vld [vmem:[#allocation2] sm:$0xf]
    %v110 = vld [vmem:[#allocation2 + $0x4] sm:$0xf]
    %v111 = vld [vmem:[#allocation2 + $0x8] sm:$0xf]
    %v112 = vld [vmem:[#allocation2 + $0xc] sm:$0xf]
    %v113 = vld [vmem:[#allocation2 + $0x10] sm:$0xf]
    %v114 = vld [vmem:[#allocation2 + $0x14] sm:$0xf]
    %v115 = vld [vmem:[#allocation2 + $0x18] sm:$0xf]
    %v116 = vld [vmem:[#allocation2 + $0x1c] sm:$0xf]
    %v117 = vld [vmem:[#allocation2 + $0x20] sm:$0xf]
    %v118 = vld [vmem:[#allocation2 + $0x24] sm:$0xf]
    %v119 = vld [vmem:[#allocation2 + $0x28] sm:$0xf]
    %v120 = vld [vmem:[#allocation2 + $0x2c] sm:$0xf]
    %v121 = vld [vmem:[#allocation2 + $0x30] sm:$0xf]
    %v122 = vld [vmem:[#allocation2 + $0x34] sm:$0xf]
    %v123 = vld [vmem:[#allocation2 + $0x38] sm:$0xf]
    %v124 = vld [vmem:[#allocation2 + $0x3c] sm:$0xf]
    %v125 = vld [vmem:[%s5] sm:$0x1]
    %v127 = vlaneseq
    %v128 = vshrl.u32 %v127, 7
    %v129 = vsub.s32 0, %v128
    %v130 = vrot.slane %v125, %v129
    %v148 = vunpack.c.l.b16 %v109
    %v149 = vunpack.c.l.b16 %v110
    %v150 = vunpack.c.l.b16 %v111
    %v151 = vunpack.c.l.b16 %v112
    %v152 = vunpack.c.l.b16 %v113
    %v153 = vunpack.c.l.b16 %v114
    %v154 = vunpack.c.l.b16 %v115
    %v155 = vunpack.c.l.b16 %v116
    %v156 = vunpack.c.l.b16 %v117
    %v157 = vunpack.c.l.b16 %v118
    %v158 = vunpack.c.l.b16 %v119
    %v159 = vunpack.c.l.b16 %v120
    %v160 = vunpack.c.l.b16 %v121
    %v161 = vunpack.c.l.b16 %v122
    %v162 = vunpack.c.l.b16 %v123
    %v163 = vunpack.c.l.b16 %v124
    %v164 = vpack.c.b16 %v149, %v148
    %v165 = vpack.c.b16 %v151, %v150
    %v166 = vpack.c.b16 %v153, %v152
    %v167 = vpack.c.b16 %v155, %v154
    %v168 = vpack.c.b16 %v157, %v156
    %v169 = vpack.c.b16 %v159, %v158
    %v170 = vpack.c.b16 %v161, %v160
    %v171 = vpack.c.b16 %v163, %v162
    %180 = vmatprep.subr.bf16.mxu0 0
    %181 = vmatpush1.bf16.msra.mxu0 %v164
    %182 = vmatprep.subr.bf16.mxu0 0
    %183 = vmatpush1.bf16.msra.mxu0 %v165
    %184 = vmatprep.subr.bf16.mxu0 0
    %185 = vmatpush1.bf16.msra.mxu0 %v166
    %186 = vmatprep.subr.bf16.mxu0 0
    %187 = vmatpush1.bf16.msra.mxu0 %v167
    %188 = vmatprep.subr.bf16.mxu0 0
    %189 = vmatpush1.bf16.msra.mxu0 %v168
    %190 = vmatprep.subr.bf16.mxu0 0
    %191 = vmatpush1.bf16.msra.mxu0 %v169
    %192 = vmatprep.subr.bf16.mxu0 0
    %193 = vmatpush1.bf16.msra.mxu0 %v170
    %194 = vmatprep.subr.bf16.mxu0 0
    %195 = vmatpush1.bf16.msra.mxu0 %v171
    %196 = vmatprep.subr.bf16.mxu0 0
    %197 = vmatpush1.bf16.msra.mxu0 0
    %198 = vmatprep.subr.bf16.mxu0 0
    %199 = vmatpush1.bf16.msra.mxu0 0
    %200 = vmatprep.subr.bf16.mxu0 0
    %201 = vmatpush1.bf16.msra.mxu0 0
    %202 = vmatprep.subr.bf16.mxu0 0
    %203 = vmatpush1.bf16.msra.mxu0 0
    %204 = vmatprep.subr.bf16.mxu0 0
    %205 = vmatpush1.bf16.msra.mxu0 0
    %206 = vmatprep.subr.bf16.mxu0 0
    %207 = vmatpush1.bf16.msra.mxu0 0
    %208 = vmatprep.subr.bf16.mxu0 0
    %209 = vmatpush1.bf16.msra.mxu0 0
    %210 = vmatprep.subr.bf16.mxu0 0
    %211 = vmatpush1.bf16.msra.mxu0 0
    %212 = vmatprep.mubr.bf16.mxu0 0
    %213 = vmatmul.mubr.bf16.gmra.mrb[0].mxu0 %v108
    %v214 = vpop.f32.mrb[0].mxu0
    %v215 = vadd.f32 %v130, %v214
    %v216 = vpop.f32.mrb[0].mxu0
    %v217 = vpop.f32.mrb[0].mxu0
    %v218 = vpop.f32.mrb[0].mxu0
    %219 = vdwg.mxu0
    %v220 = vxor.u32 %v215, 2147483648
    %v221 = vmul.f32 %v220, 1.442695
    %v222 = vpow.pop %v221
    %v223 = vadd.f32 %v222, 1.0
    %v224 = vrcp.pop %v223
    %v225 = vmul.f32 1.0, %v224
    %v226 = vmul.f32 %v215, %v225
    %v227 = vadd.f32 %v107, %v226
    %v228 = vpack.c.bf16 %v227, %v227
    %s229 = scalar_lea.vmem [#allocation2], 64
    %v230 = vld [vmem:[%s229] sm:$0xf]
    %v231 = vld [vmem:[%s229 + $0x4] sm:$0xf]
    %v232 = vld [vmem:[%s229 + $0x8] sm:$0xf]
    %v233 = vld [vmem:[%s229 + $0xc] sm:$0xf]
    %v234 = vld [vmem:[%s229 + $0x10] sm:$0xf]
    %v235 = vld [vmem:[%s229 + $0x14] sm:$0xf]
    %v236 = vld [vmem:[%s229 + $0x18] sm:$0xf]
    %v237 = vld [vmem:[%s229 + $0x1c] sm:$0xf]
    %v238 = vld [vmem:[%s229 + $0x20] sm:$0xf]
    %v239 = vld [vmem:[%s229 + $0x24] sm:$0xf]
    %v240 = vld [vmem:[%s229 + $0x28] sm:$0xf]
    %v241 = vld [vmem:[%s229 + $0x2c] sm:$0xf]
    %v242 = vld [vmem:[%s229 + $0x30] sm:$0xf]
    %v243 = vld [vmem:[%s229 + $0x34] sm:$0xf]
    %v244 = vld [vmem:[%s229 + $0x38] sm:$0xf]
    %v245 = vld [vmem:[%s229 + $0x3c] sm:$0xf]
    %s246 = scalar_lea.vmem %s5, 1
    %v247 = vld [vmem:[%s246] sm:$0x1]
    %v249 = vlaneseq
    %v250 = vshrl.u32 %v249, 7
    %v251 = vsub.s32 0, %v250
    %v252 = vrot.slane %v247, %v251
    %v270 = vunpack.c.l.b16 %v230
    %v271 = vunpack.c.l.b16 %v231
    %v272 = vunpack.c.l.b16 %v232
    %v273 = vunpack.c.l.b16 %v233
    %v274 = vunpack.c.l.b16 %v234
    %v275 = vunpack.c.l.b16 %v235
    %v276 = vunpack.c.l.b16 %v236
    %v277 = vunpack.c.l.b16 %v237
    %v278 = vunpack.c.l.b16 %v238
    %v279 = vunpack.c.l.b16 %v239
    %v280 = vunpack.c.l.b16 %v240
    %v281 = vunpack.c.l.b16 %v241
    %v282 = vunpack.c.l.b16 %v242
    %v283 = vunpack.c.l.b16 %v243
    %v284 = vunpack.c.l.b16 %v244
    %v285 = vunpack.c.l.b16 %v245
    %v286 = vpack.c.b16 %v271, %v270
    %v287 = vpack.c.b16 %v273, %v272
    %v288 = vpack.c.b16 %v275, %v274
    %v289 = vpack.c.b16 %v277, %v276
    %v290 = vpack.c.b16 %v279, %v278
    %v291 = vpack.c.b16 %v281, %v280
    %v292 = vpack.c.b16 %v283, %v282
    %v293 = vpack.c.b16 %v285, %v284
    %302 = vmatprep.subr.bf16.mxu0 0
    %303 = vmatpush1.bf16.msra.mxu0 %v286
    %304 = vmatprep.subr.bf16.mxu0 0
    %305 = vmatpush1.bf16.msra.mxu0 %v287
    %306 = vmatprep.subr.bf16.mxu0 0
    %307 = vmatpush1.bf16.msra.mxu0 %v288
    %308 = vmatprep.subr.bf16.mxu0 0
    %309 = vmatpush1.bf16.msra.mxu0 %v289
    %310 = vmatprep.subr.bf16.mxu0 0
    %311 = vmatpush1.bf16.msra.mxu0 %v290
    %312 = vmatprep.subr.bf16.mxu0 0
    %313 = vmatpush1.bf16.msra.mxu0 %v291
    %314 = vmatprep.subr.bf16.mxu0 0
    %315 = vmatpush1.bf16.msra.mxu0 %v292
    %316 = vmatprep.subr.bf16.mxu0 0
    %317 = vmatpush1.bf16.msra.mxu0 %v293
    %318 = vmatprep.subr.bf16.mxu0 0
    %319 = vmatpush1.bf16.msra.mxu0 0
    %320 = vmatprep.subr.bf16.mxu0 0
    %321 = vmatpush1.bf16.msra.mxu0 0
    %322 = vmatprep.subr.bf16.mxu0 0
    %323 = vmatpush1.bf16.msra.mxu0 0
    %324 = vmatprep.subr.bf16.mxu0 0
    %325 = vmatpush1.bf16.msra.mxu0 0
    %326 = vmatprep.subr.bf16.mxu0 0
    %327 = vmatpush1.bf16.msra.mxu0 0
    %328 = vmatprep.subr.bf16.mxu0 0
    %329 = vmatpush1.bf16.msra.mxu0 0
    %330 = vmatprep.subr.bf16.mxu0 0
    %331 = vmatpush1.bf16.msra.mxu0 0
    %332 = vmatprep.subr.bf16.mxu0 0
    %333 = vmatpush1.bf16.msra.mxu0 0
    %334 = vmatprep.mubr.bf16.mxu0 0
    %335 = vmatmul.mubr.bf16.gmra.mrb[0].mxu0 %v228
    %v336 = vpop.f32.mrb[0].mxu0
    %v337 = vadd.f32 %v252, %v336
    %v338 = vpop.f32.mrb[0].mxu0
    %v339 = vpop.f32.mrb[0].mxu0
    %v340 = vpop.f32.mrb[0].mxu0
    %341 = vdwg.mxu0
    %v342 = vxor.u32 %v337, 2147483648
    %v343 = vmul.f32 %v342, 1.442695
    %v344 = vpow.pop %v343
    %v345 = vadd.f32 %v344, 1.0
    %v346 = vrcp.pop %v345
    %v347 = vmul.f32 1.0, %v346
    %v348 = vmul.f32 %v337, %v347
    %v349 = vadd.f32 %v227, %v348
    %v350 = vpack.c.bf16 %v349, %v349
    %s351 = scalar_lea.vmem [#allocation2], 128
    %v352 = vld [vmem:[%s351] sm:$0xf]
    %v353 = vld [vmem:[%s351 + $0x4] sm:$0xf]
    %v354 = vld [vmem:[%s351 + $0x8] sm:$0xf]
    %v355 = vld [vmem:[%s351 + $0xc] sm:$0xf]
    %v356 = vld [vmem:[%s351 + $0x10] sm:$0xf]
    %v357 = vld [vmem:[%s351 + $0x14] sm:$0xf]
    %v358 = vld [vmem:[%s351 + $0x18] sm:$0xf]
    %v359 = vld [vmem:[%s351 + $0x1c] sm:$0xf]
    %v360 = vld [vmem:[%s351 + $0x20] sm:$0xf]
    %v361 = vld [vmem:[%s351 + $0x24] sm:$0xf]
    %v362 = vld [vmem:[%s351 + $0x28] sm:$0xf]
    %v363 = vld [vmem:[%s351 + $0x2c] sm:$0xf]
    %v364 = vld [vmem:[%s351 + $0x30] sm:$0xf]
    %v365 = vld [vmem:[%s351 + $0x34] sm:$0xf]
    %v366 = vld [vmem:[%s351 + $0x38] sm:$0xf]
    %v367 = vld [vmem:[%s351 + $0x3c] sm:$0xf]
    %s368 = scalar_lea.vmem %s5, 2
    %v369 = vld [vmem:[%s368] sm:$0x1]
    %v371 = vlaneseq
    %v372 = vshrl.u32 %v371, 7
    %v373 = vsub.s32 0, %v372
    %v374 = vrot.slane %v369, %v373
    %v392 = vunpack.c.l.b16 %v352
    %v393 = vunpack.c.l.b16 %v353
    %v394 = vunpack.c.l.b16 %v354
    %v395 = vunpack.c.l.b16 %v355
    %v396 = vunpack.c.l.b16 %v356
    %v397 = vunpack.c.l.b16 %v357
    %v398 = vunpack.c.l.b16 %v358
    %v399 = vunpack.c.l.b16 %v359
    %v400 = vunpack.c.l.b16 %v360
    %v401 = vunpack.c.l.b16 %v361
    %v402 = vunpack.c.l.b16 %v362
    %v403 = vunpack.c.l.b16 %v363
    %v404 = vunpack.c.l.b16 %v364
    %v405 = vunpack.c.l.b16 %v365
    %v406 = vunpack.c.l.b16 %v366
    %v407 = vunpack.c.l.b16 %v367
    %v408 = vpack.c.b16 %v393, %v392
    %v409 = vpack.c.b16 %v395, %v394
    %v410 = vpack.c.b16 %v397, %v396
    %v411 = vpack.c.b16 %v399, %v398
    %v412 = vpack.c.b16 %v401, %v400
    %v413 = vpack.c.b16 %v403, %v402
    %v414 = vpack.c.b16 %v405, %v404
    %v415 = vpack.c.b16 %v407, %v406
    %424 = vmatprep.subr.bf16.mxu0 0
    %425 = vmatpush1.bf16.msra.mxu0 %v408
    %426 = vmatprep.subr.bf16.mxu0 0
    %427 = vmatpush1.bf16.msra.mxu0 %v409
    %428 = vmatprep.subr.bf16.mxu0 0
    %429 = vmatpush1.bf16.msra.mxu0 %v410
    %430 = vmatprep.subr.bf16.mxu0 0
    %431 = vmatpush1.bf16.msra.mxu0 %v411
    %432 = vmatprep.subr.bf16.mxu0 0
    %433 = vmatpush1.bf16.msra.mxu0 %v412
    %434 = vmatprep.subr.bf16.mxu0 0
    %435 = vmatpush1.bf16.msra.mxu0 %v413
    %436 = vmatprep.subr.bf16.mxu0 0
    %437 = vmatpush1.bf16.msra.mxu0 %v414
    %438 = vmatprep.subr.bf16.mxu0 0
    %439 = vmatpush1.bf16.msra.mxu0 %v415
    %440 = vmatprep.subr.bf16.mxu0 0
    %441 = vmatpush1.bf16.msra.mxu0 0
    %442 = vmatprep.subr.bf16.mxu0 0
    %443 = vmatpush1.bf16.msra.mxu0 0
    %444 = vmatprep.subr.bf16.mxu0 0
    %445 = vmatpush1.bf16.msra.mxu0 0
    %446 = vmatprep.subr.bf16.mxu0 0
    %447 = vmatpush1.bf16.msra.mxu0 0
    %448 = vmatprep.subr.bf16.mxu0 0
    %449 = vmatpush1.bf16.msra.mxu0 0
    %450 = vmatprep.subr.bf16.mxu0 0
    %451 = vmatpush1.bf16.msra.mxu0 0
    %452 = vmatprep.subr.bf16.mxu0 0
    %453 = vmatpush1.bf16.msra.mxu0 0
    %454 = vmatprep.subr.bf16.mxu0 0
    %455 = vmatpush1.bf16.msra.mxu0 0
    %456 = vmatprep.mubr.bf16.mxu0 0
    %457 = vmatmul.mubr.bf16.gmra.mrb[0].mxu0 %v350
    %v458 = vpop.f32.mrb[0].mxu0
    %v459 = vadd.f32 %v374, %v458
    %v460 = vpop.f32.mrb[0].mxu0
    %v461 = vpop.f32.mrb[0].mxu0
    %v462 = vpop.f32.mrb[0].mxu0
    %463 = vdwg.mxu0
    %v464 = vxor.u32 %v459, 2147483648
    %v465 = vmul.f32 %v464, 1.442695
    %v466 = vpow.pop %v465
    %v467 = vadd.f32 %v466, 1.0
    %v468 = vrcp.pop %v467
    %v469 = vmul.f32 1.0, %v468
    %v470 = vmul.f32 %v459, %v469
    %v471 = vadd.f32 %v349, %v470
    %v472 = vpack.c.bf16 %v471, %v471
    %s473 = scalar_lea.vmem [#allocation2], 192
    %v474 = vld [vmem:[%s473] sm:$0xf]
    %v475 = vld [vmem:[%s473 + $0x4] sm:$0xf]
    %v476 = vld [vmem:[%s473 + $0x8] sm:$0xf]
    %v477 = vld [vmem:[%s473 + $0xc] sm:$0xf]
    %v478 = vld [vmem:[%s473 + $0x10] sm:$0xf]
    %v479 = vld [vmem:[%s473 + $0x14] sm:$0xf]
    %v480 = vld [vmem:[%s473 + $0x18] sm:$0xf]
    %v481 = vld [vmem:[%s473 + $0x1c] sm:$0xf]
    %v482 = vld [vmem:[%s473 + $0x20] sm:$0xf]
    %v483 = vld [vmem:[%s473 + $0x24] sm:$0xf]
    %v484 = vld [vmem:[%s473 + $0x28] sm:$0xf]
    %v485 = vld [vmem:[%s473 + $0x2c] sm:$0xf]
    %v486 = vld [vmem:[%s473 + $0x30] sm:$0xf]
    %v487 = vld [vmem:[%s473 + $0x34] sm:$0xf]
    %v488 = vld [vmem:[%s473 + $0x38] sm:$0xf]
    %v489 = vld [vmem:[%s473 + $0x3c] sm:$0xf]
    %s490 = scalar_lea.vmem %s5, 3
    %v491 = vld [vmem:[%s490] sm:$0x1]
    %v493 = vlaneseq
    %v494 = vshrl.u32 %v493, 7
    %v495 = vsub.s32 0, %v494
    %v496 = vrot.slane %v491, %v495
    %v514 = vunpack.c.l.b16 %v474
    %v515 = vunpack.c.l.b16 %v475
    %v516 = vunpack.c.l.b16 %v476
    %v517 = vunpack.c.l.b16 %v477
    %v518 = vunpack.c.l.b16 %v478
    %v519 = vunpack.c.l.b16 %v479
    %v520 = vunpack.c.l.b16 %v480
    %v521 = vunpack.c.l.b16 %v481
    %v522 = vunpack.c.l.b16 %v482
    %v523 = vunpack.c.l.b16 %v483
    %v524 = vunpack.c.l.b16 %v484
    %v525 = vunpack.c.l.b16 %v485
    %v526 = vunpack.c.l.b16 %v486
    %v527 = vunpack.c.l.b16 %v487
    %v528 = vunpack.c.l.b16 %v488
    %v529 = vunpack.c.l.b16 %v489
    %v530 = vpack.c.b16 %v515, %v514
    %v531 = vpack.c.b16 %v517, %v516
    %v532 = vpack.c.b16 %v519, %v518
    %v533 = vpack.c.b16 %v521, %v520
    %v534 = vpack.c.b16 %v523, %v522
    %v535 = vpack.c.b16 %v525, %v524
    %v536 = vpack.c.b16 %v527, %v526
    %v537 = vpack.c.b16 %v529, %v528
    %546 = vmatprep.subr.bf16.mxu0 0
    %547 = vmatpush1.bf16.msra.mxu0 %v530
    %548 = vmatprep.subr.bf16.mxu0 0
    %549 = vmatpush1.bf16.msra.mxu0 %v531
    %550 = vmatprep.subr.bf16.mxu0 0
    %551 = vmatpush1.bf16.msra.mxu0 %v532
    %552 = vmatprep.subr.bf16.mxu0 0
    %553 = vmatpush1.bf16.msra.mxu0 %v533
    %554 = vmatprep.subr.bf16.mxu0 0
    %555 = vmatpush1.bf16.msra.mxu0 %v534
    %556 = vmatprep.subr.bf16.mxu0 0
    %557 = vmatpush1.bf16.msra.mxu0 %v535
    %558 = vmatprep.subr.bf16.mxu0 0
    %559 = vmatpush1.bf16.msra.mxu0 %v536
    %560 = vmatprep.subr.bf16.mxu0 0
    %561 = vmatpush1.bf16.msra.mxu0 %v537
    %562 = vmatprep.subr.bf16.mxu0 0
    %563 = vmatpush1.bf16.msra.mxu0 0
    %564 = vmatprep.subr.bf16.mxu0 0
    %565 = vmatpush1.bf16.msra.mxu0 0
    %566 = vmatprep.subr.bf16.mxu0 0
    %567 = vmatpush1.bf16.msra.mxu0 0
    %568 = vmatprep.subr.bf16.mxu0 0
    %569 = vmatpush1.bf16.msra.mxu0 0
    %570 = vmatprep.subr.bf16.mxu0 0
    %571 = vmatpush1.bf16.msra.mxu0 0
    %572 = vmatprep.subr.bf16.mxu0 0
    %573 = vmatpush1.bf16.msra.mxu0 0
    %574 = vmatprep.subr.bf16.mxu0 0
    %575 = vmatpush1.bf16.msra.mxu0 0
    %576 = vmatprep.subr.bf16.mxu0 0
    %577 = vmatpush1.bf16.msra.mxu0 0
    %578 = vmatprep.mubr.bf16.mxu0 0
    %579 = vmatmul.mubr.bf16.gmra.mrb[0].mxu0 %v472
    %v580 = vpop.f32.mrb[0].mxu0
    %v581 = vadd.f32 %v496, %v580
    %v582 = vpop.f32.mrb[0].mxu0
    %v583 = vpop.f32.mrb[0].mxu0
    %v584 = vpop.f32.mrb[0].mxu0
    %585 = vdwg.mxu0
    %v586 = vxor.u32 %v581, 2147483648
    %v587 = vmul.f32 %v586, 1.442695
    %v588 = vpow.pop %v587
    %v589 = vadd.f32 %v588, 1.0
    %v590 = vrcp.pop %v589
    %v591 = vmul.f32 1.0, %v590
    %v592 = vmul.f32 %v581, %v591
    %v593 = vadd.f32 %v471, %v592
    %v594 = vpack.c.bf16 %v593, %v593
    %s595 = scalar_lea.vmem [#allocation2], 256
    %v596 = vld [vmem:[%s595] sm:$0xf]
    %v597 = vld [vmem:[%s595 + $0x4] sm:$0xf]
    %v598 = vld [vmem:[%s595 + $0x8] sm:$0xf]
    %v599 = vld [vmem:[%s595 + $0xc] sm:$0xf]
    %v600 = vld [vmem:[%s595 + $0x10] sm:$0xf]
    %v601 = vld [vmem:[%s595 + $0x14] sm:$0xf]
    %v602 = vld [vmem:[%s595 + $0x18] sm:$0xf]
    %v603 = vld [vmem:[%s595 + $0x1c] sm:$0xf]
    %v604 = vld [vmem:[%s595 + $0x20] sm:$0xf]
    %v605 = vld [vmem:[%s595 + $0x24] sm:$0xf]
    %v606 = vld [vmem:[%s595 + $0x28] sm:$0xf]
    %v607 = vld [vmem:[%s595 + $0x2c] sm:$0xf]
    %v608 = vld [vmem:[%s595 + $0x30] sm:$0xf]
    %v609 = vld [vmem:[%s595 + $0x34] sm:$0xf]
    %v610 = vld [vmem:[%s595 + $0x38] sm:$0xf]
    %v611 = vld [vmem:[%s595 + $0x3c] sm:$0xf]
    %s612 = scalar_lea.vmem %s5, 4
    %v613 = vld [vmem:[%s612] sm:$0x1]
    %v615 = vlaneseq
    %v616 = vshrl.u32 %v615, 7
    %v617 = vsub.s32 0, %v616
    %v618 = vrot.slane %v613, %v617
    %v636 = vunpack.c.l.b16 %v596
    %v637 = vunpack.c.l.b16 %v597
    %v638 = vunpack.c.l.b16 %v598
    %v639 = vunpack.c.l.b16 %v599
    %v640 = vunpack.c.l.b16 %v600
    %v641 = vunpack.c.l.b16 %v601
    %v642 = vunpack.c.l.b16 %v602
    %v643 = vunpack.c.l.b16 %v603
    %v644 = vunpack.c.l.b16 %v604
    %v645 = vunpack.c.l.b16 %v605
    %v646 = vunpack.c.l.b16 %v606
    %v647 = vunpack.c.l.b16 %v607
    %v648 = vunpack.c.l.b16 %v608
    %v649 = vunpack.c.l.b16 %v609
    %v650 = vunpack.c.l.b16 %v610
    %v651 = vunpack.c.l.b16 %v611
    %v652 = vpack.c.b16 %v637, %v636
    %v653 = vpack.c.b16 %v639, %v638
    %v654 = vpack.c.b16 %v641, %v640
    %v655 = vpack.c.b16 %v643, %v642
    %v656 = vpack.c.b16 %v645, %v644
    %v657 = vpack.c.b16 %v647, %v646
    %v658 = vpack.c.b16 %v649, %v648
    %v659 = vpack.c.b16 %v651, %v650
    %668 = vmatprep.subr.bf16.mxu0 0
    %669 = vmatpush1.bf16.msra.mxu0 %v652
    %670 = vmatprep.subr.bf16.mxu0 0
    %671 = vmatpush1.bf16.msra.mxu0 %v653
    %672 = vmatprep.subr.bf16.mxu0 0
    %673 = vmatpush1.bf16.msra.mxu0 %v654
    %674 = vmatprep.subr.bf16.mxu0 0
    %675 = vmatpush1.bf16.msra.mxu0 %v655
    %676 = vmatprep.subr.bf16.mxu0 0
    %677 = vmatpush1.bf16.msra.mxu0 %v656
    %678 = vmatprep.subr.bf16.mxu0 0
    %679 = vmatpush1.bf16.msra.mxu0 %v657
    %680 = vmatprep.subr.bf16.mxu0 0
    %681 = vmatpush1.bf16.msra.mxu0 %v658
    %682 = vmatprep.subr.bf16.mxu0 0
    %683 = vmatpush1.bf16.msra.mxu0 %v659
    %684 = vmatprep.subr.bf16.mxu0 0
    %685 = vmatpush1.bf16.msra.mxu0 0
    %686 = vmatprep.subr.bf16.mxu0 0
    %687 = vmatpush1.bf16.msra.mxu0 0
    %688 = vmatprep.subr.bf16.mxu0 0
    %689 = vmatpush1.bf16.msra.mxu0 0
    %690 = vmatprep.subr.bf16.mxu0 0
    %691 = vmatpush1.bf16.msra.mxu0 0
    %692 = vmatprep.subr.bf16.mxu0 0
    %693 = vmatpush1.bf16.msra.mxu0 0
    %694 = vmatprep.subr.bf16.mxu0 0
    %695 = vmatpush1.bf16.msra.mxu0 0
    %696 = vmatprep.subr.bf16.mxu0 0
    %697 = vmatpush1.bf16.msra.mxu0 0
    %698 = vmatprep.subr.bf16.mxu0 0
    %699 = vmatpush1.bf16.msra.mxu0 0
    %700 = vmatprep.mubr.bf16.mxu0 0
    %701 = vmatmul.mubr.bf16.gmra.mrb[0].mxu0 %v594
    %v702 = vpop.f32.mrb[0].mxu0
    %v703 = vadd.f32 %v618, %v702
    %v704 = vpop.f32.mrb[0].mxu0
    %v705 = vpop.f32.mrb[0].mxu0
    %v706 = vpop.f32.mrb[0].mxu0
    %707 = vdwg.mxu0
    %v708 = vxor.u32 %v703, 2147483648
    %v709 = vmul.f32 %v708, 1.442695
    %v710 = vpow.pop %v709
    %v711 = vadd.f32 %v710, 1.0
    %v712 = vrcp.pop %v711
    %v713 = vmul.f32 1.0, %v712
    %v714 = vmul.f32 %v703, %v713
    %v715 = vadd.f32 %v593, %v714
    %v716 = vpack.c.bf16 %v715, %v715
    %v717 = vld [vmem:[#allocation5] sm:$0xf]
    %v718 = vld [vmem:[#allocation5 + $0x4] sm:$0xf]
    %v719 = vld [vmem:[#allocation5 + $0x8] sm:$0xf]
    %v720 = vld [vmem:[#allocation5 + $0xc] sm:$0xf]
    %v721 = vld [vmem:[#allocation5 + $0x10] sm:$0xf]
    %v722 = vld [vmem:[#allocation5 + $0x14] sm:$0xf]
    %v723 = vld [vmem:[#allocation5 + $0x18] sm:$0xf]
    %v724 = vld [vmem:[#allocation5 + $0x1c] sm:$0xf]
    %v725 = vld [vmem:[#allocation5 + $0x20] sm:$0xf]
    %v726 = vld [vmem:[#allocation5 + $0x24] sm:$0xf]
    %v727 = vld [vmem:[#allocation5 + $0x28] sm:$0xf]
    %v728 = vld [vmem:[#allocation5 + $0x2c] sm:$0xf]
    %v729 = vld [vmem:[#allocation5 + $0x30] sm:$0xf]
    %v730 = vld [vmem:[#allocation5 + $0x34] sm:$0xf]
    %v731 = vld [vmem:[#allocation5 + $0x38] sm:$0xf]
    %v732 = vld [vmem:[#allocation5 + $0x3c] sm:$0xf]
    %v733 = vld [vmem:[%s7] sm:$0x1]
    %v735 = vlaneseq
    %v736 = vshrl.u32 %v735, 7
    %v737 = vsub.s32 0, %v736
    %v738 = vrot.slane %v733, %v737
    %v756 = vunpack.c.l.b16 %v717
    %v757 = vunpack.c.l.b16 %v718
    %v758 = vunpack.c.l.b16 %v719
    %v759 = vunpack.c.l.b16 %v720
    %v760 = vunpack.c.l.b16 %v721
    %v761 = vunpack.c.l.b16 %v722
    %v762 = vunpack.c.l.b16 %v723
    %v763 = vunpack.c.l.b16 %v724
    %v764 = vunpack.c.l.b16 %v725
    %v765 = vunpack.c.l.b16 %v726
    %v766 = vunpack.c.l.b16 %v727
    %v767 = vunpack.c.l.b16 %v728
    %v768 = vunpack.c.l.b16 %v729
    %v769 = vunpack.c.l.b16 %v730
    %v770 = vunpack.c.l.b16 %v731
    %v771 = vunpack.c.l.b16 %v732
    %v772 = vpack.c.b16 %v757, %v756
    %v773 = vpack.c.b16 %v759, %v758
    %v774 = vpack.c.b16 %v761, %v760
    %v775 = vpack.c.b16 %v763, %v762
    %v776 = vpack.c.b16 %v765, %v764
    %v777 = vpack.c.b16 %v767, %v766
    %v778 = vpack.c.b16 %v769, %v768
    %v779 = vpack.c.b16 %v771, %v770
    %788 = vmatprep.subr.bf16.mxu0 0
    %789 = vmatpush1.bf16.msra.mxu0 %v772
    %790 = vmatprep.subr.bf16.mxu0 0
    %791 = vmatpush1.bf16.msra.mxu0 %v773
    %792 = vmatprep.subr.bf16.mxu0 0
    %793 = vmatpush1.bf16.msra.mxu0 %v774
    %794 = vmatprep.subr.bf16.mxu0 0
    %795 = vmatpush1.bf16.msra.mxu0 %v775
    %796 = vmatprep.subr.bf16.mxu0 0
    %797 = vmatpush1.bf16.msra.mxu0 %v776
    %798 = vmatprep.subr.bf16.mxu0 0
    %799 = vmatpush1.bf16.msra.mxu0 %v777
    %800 = vmatprep.subr.bf16.mxu0 0
    %801 = vmatpush1.bf16.msra.mxu0 %v778
    %802 = vmatprep.subr.bf16.mxu0 0
    %803 = vmatpush1.bf16.msra.mxu0 %v779
    %804 = vmatprep.subr.bf16.mxu0 0
    %805 = vmatpush1.bf16.msra.mxu0 0
    %806 = vmatprep.subr.bf16.mxu0 0
    %807 = vmatpush1.bf16.msra.mxu0 0
    %808 = vmatprep.subr.bf16.mxu0 0
    %809 = vmatpush1.bf16.msra.mxu0 0
    %810 = vmatprep.subr.bf16.mxu0 0
    %811 = vmatpush1.bf16.msra.mxu0 0
    %812 = vmatprep.subr.bf16.mxu0 0
    %813 = vmatpush1.bf16.msra.mxu0 0
    %814 = vmatprep.subr.bf16.mxu0 0
    %815 = vmatpush1.bf16.msra.mxu0 0
    %816 = vmatprep.subr.bf16.mxu0 0
    %817 = vmatpush1.bf16.msra.mxu0 0
    %818 = vmatprep.subr.bf16.mxu0 0
    %819 = vmatpush1.bf16.msra.mxu0 0
    %820 = vmatprep.mubr.bf16.mxu0 0
    %821 = vmatmul.mubr.bf16.gmra.mrb[0].mxu0 %v716
    %v822 = vpop.f32.mrb[0].mxu0
    %v823 = vadd.f32 %v738, %v822
    %v824 = vpop.f32.mrb[0].mxu0
    %v825 = vpop.f32.mrb[0].mxu0
    %v826 = vpop.f32.mrb[0].mxu0
    %827 = vdwg.mxu0
    %v828 = vadd.f32 %v78, %v823
    %v829 = vxor.u32 %v828, 2147483648
    %v830 = vmul.f32 %v829, 1.442695
    %v831 = vpow.pop %v830
    %v832 = vadd.f32 %v831, 1.0
    %v833 = vrcp.pop %v832
    %v834 = vmul.f32 1.0, %v833
    %v835 = vmul.f32 %v828, %v834
    %v836 = vpack.c.bf16 %v835, %v835
    %v837 = vld [vmem:[#allocation7] sm:$0xf]
    %v838 = vld [vmem:[#allocation7 + $0x4] sm:$0xf]
    %v839 = vld [vmem:[#allocation7 + $0x8] sm:$0xf]
    %v840 = vld [vmem:[#allocation7 + $0xc] sm:$0xf]
    %v841 = vld [vmem:[#allocation7 + $0x10] sm:$0xf]
    %v842 = vld [vmem:[#allocation7 + $0x14] sm:$0xf]
    %v843 = vld [vmem:[#allocation7 + $0x18] sm:$0xf]
    %v844 = vld [vmem:[#allocation7 + $0x1c] sm:$0xf]
    %v845 = vld [vmem:[#allocation7 + $0x20] sm:$0xf]
    %v846 = vld [vmem:[#allocation7 + $0x24] sm:$0xf]
    %v847 = vld [vmem:[#allocation7 + $0x28] sm:$0xf]
    %v848 = vld [vmem:[#allocation7 + $0x2c] sm:$0xf]
    %v849 = vld [vmem:[#allocation7 + $0x30] sm:$0xf]
    %v850 = vld [vmem:[#allocation7 + $0x34] sm:$0xf]
    %v851 = vld [vmem:[#allocation7 + $0x38] sm:$0xf]
    %v852 = vld [vmem:[#allocation7 + $0x3c] sm:$0xf]
    %v853 = vld [vmem:[%s9] sm:$0x1]
    %v855 = vlaneseq
    %v856 = vshrl.u32 %v855, 7
    %v857 = vsub.s32 0, %v856
    %v858 = vrot.slane %v853, %v857
    %v876 = vunpack.c.l.b16 %v837
    %v877 = vunpack.c.l.b16 %v838
    %v878 = vunpack.c.l.b16 %v839
    %v879 = vunpack.c.l.b16 %v840
    %v880 = vunpack.c.l.b16 %v841
    %v881 = vunpack.c.l.b16 %v842
    %v882 = vunpack.c.l.b16 %v843
    %v883 = vunpack.c.l.b16 %v844
    %v884 = vunpack.c.l.b16 %v845
    %v885 = vunpack.c.l.b16 %v846
    %v886 = vunpack.c.l.b16 %v847
    %v887 = vunpack.c.l.b16 %v848
    %v888 = vunpack.c.l.b16 %v849
    %v889 = vunpack.c.l.b16 %v850
    %v890 = vunpack.c.l.b16 %v851
    %v891 = vunpack.c.l.b16 %v852
    %v892 = vpack.c.b16 %v877, %v876
    %v893 = vpack.c.b16 %v879, %v878
    %v894 = vpack.c.b16 %v881, %v880
    %v895 = vpack.c.b16 %v883, %v882
    %v896 = vpack.c.b16 %v885, %v884
    %v897 = vpack.c.b16 %v887, %v886
    %v898 = vpack.c.b16 %v889, %v888
    %v899 = vpack.c.b16 %v891, %v890
    %908 = vmatprep.subr.bf16.mxu0 0
    %909 = vmatpush1.bf16.msra.mxu0 %v892
    %910 = vmatprep.subr.bf16.mxu0 0
    %911 = vmatpush1.bf16.msra.mxu0 %v893
    %912 = vmatprep.subr.bf16.mxu0 0
    %913 = vmatpush1.bf16.msra.mxu0 %v894
    %914 = vmatprep.subr.bf16.mxu0 0
    %915 = vmatpush1.bf16.msra.mxu0 %v895
    %916 = vmatprep.subr.bf16.mxu0 0
    %917 = vmatpush1.bf16.msra.mxu0 %v896
    %918 = vmatprep.subr.bf16.mxu0 0
    %919 = vmatpush1.bf16.msra.mxu0 %v897
    %920 = vmatprep.subr.bf16.mxu0 0
    %921 = vmatpush1.bf16.msra.mxu0 %v898
    %922 = vmatprep.subr.bf16.mxu0 0
    %923 = vmatpush1.bf16.msra.mxu0 %v899
    %924 = vmatprep.subr.bf16.mxu0 0
    %925 = vmatpush1.bf16.msra.mxu0 0
    %926 = vmatprep.subr.bf16.mxu0 0
    %927 = vmatpush1.bf16.msra.mxu0 0
    %928 = vmatprep.subr.bf16.mxu0 0
    %929 = vmatpush1.bf16.msra.mxu0 0
    %930 = vmatprep.subr.bf16.mxu0 0
    %931 = vmatpush1.bf16.msra.mxu0 0
    %932 = vmatprep.subr.bf16.mxu0 0
    %933 = vmatpush1.bf16.msra.mxu0 0
    %934 = vmatprep.subr.bf16.mxu0 0
    %935 = vmatpush1.bf16.msra.mxu0 0
    %936 = vmatprep.subr.bf16.mxu0 0
    %937 = vmatpush1.bf16.msra.mxu0 0
    %938 = vmatprep.subr.bf16.mxu0 0
    %939 = vmatpush1.bf16.msra.mxu0 0
    %940 = vmatprep.mubr.bf16.mxu0 0
    %941 = vmatmul.mubr.bf16.gmra.mrb[0].mxu0 %v836
    %v942 = vpop.f32.mrb[0].mxu0
    %v943 = vadd.f32 %v858, %v942
    %v944 = vpop.f32.mrb[0].mxu0
    %v945 = vpop.f32.mrb[0].mxu0
    %v946 = vpop.f32.mrb[0].mxu0
    %947 = vdwg.mxu0
    %v948 = vmul.f32 %v79, 10.0
    %v949 = vmul.f32 %v948, %v948
    %v950 = vadd.f32 %v949, 0.25
    %v951 = vrsqrt.pop %v950
    %v952 = vmul.f32 %v951, %v951
    %v953 = vmul.f32 %v952, 0.25
    %v954 = vand.u32 2147483647, %v948
    %v955 = vmul.f32 %v954, %v951
    %v956 = vmul.f32 %v955, 0.5
    %958 = vset.pattern.permute.xlu0 0
    %959 = vperm.xlu0 %958, %v953
    %v960 = vpop.permute.xlu0 %959
    %v962 = vmul.f32 %v78, %v960
    %964 = vset.pattern.permute.xlu0 0
    %965 = vperm.xlu0 %964, %v956
    %v966 = vpop.permute.xlu0 %965
    %v968 = vmul.f32 %v943, %v966
    %v969 = vadd.f32 %v962, %v968
    %970 = vst [vmem:[#allocation8] sm:$0xff] %v969
    // Predicated region
    $region54: #{tpu_custom_call.1} parent=1 // pred_check
      _
    $region55: #{tpu_custom_call.1} parent=1 // pred_check_branch
      %972 = sbr.rel (0) target = $region57
    $region56: #{tpu_custom_call.1} parent=1 // pred_region
      %s974 = ssub.s32 128, 128
      %975 = vsyncadd [#allocation4], %s974
      %s977 = sshll.u32 [#allocation8], 4
      %s978 = int_to_ptr.vmem [resolvable:$true] %s977
      %980 = dma.vmem_to_hbm [thread:$0]  %s978, 128, %s10, [#allocation4]
    $region57: #{tpu_custom_call.1} parent=1 // pred_fallthru
      _
    // Predicated region
    $region58: #{tpu_custom_call.1} parent=1 // pred_check
      _
    $region59: #{tpu_custom_call.1} parent=1 // pred_check_branch
      %982 = sbr.rel (0) target = $region61
    $region60: #{tpu_custom_call.1} parent=1 // pred_region
      %983 = dma.done [#allocation4], 128
    $region61: #{tpu_custom_call.1} parent=1 // pred_fallthru
      _
    %984 = vsyncpa [#allocation3], 1
    %985 = vsyncpa [#allocation6], 1
    %986 = vsyncpa [#allocation4], 1

// kernel: tpu_custom_call.1
$region0: #{tpu_custom_call.1}
  #allocation0 [shape = 'u32[]', space=smem, size = 0x4, offset = 0x4, fixed_abs, tag = 'smem constant byte address 0x4 - core index']
  #allocation1 [shape = 'u32[144,128]{1,0:T(1,128)}', space=vmem, size = 0x12000, scoped, tag = 'internal scratch']
  %s0 = inlined_call_operand.vmem [shape: f32[8,128], index: 0, kind: input, shape index: {}]
  %s1 = inlined_call_operand.vmem [shape: f32[8,1], index: 1, kind: input, shape index: {}]
  %s2 = inlined_call_operand.vmem [shape: f32[1,128], index: 2, kind: input, shape index: {}]
  %s3 = inlined_call_operand.vmem [shape: f32[1,128], index: 3, kind: input, shape index: {}]
  %s4 = inlined_call_operand.hbm [shape: bf16[5,128,128], index: 4, kind: input, shape index: {}]
  %s5 = inlined_call_operand.vmem [shape: f32[5,1,128], index: 5, kind: input, shape index: {}]
  %s6 = inlined_call_operand.hbm [shape: bf16[128,128], index: 6, kind: input, shape index: {}]
  %s7 = inlined_call_operand.vmem [shape: f32[1,128], index: 7, kind: input, shape index: {}]
  %s8 = inlined_call_operand.hbm [shape: bf16[128,128], index: 8, kind: input, shape index: {}]
  %s9 = inlined_call_operand.vmem [shape: f32[1,128], index: 9, kind: input, shape index: {}]
  %s10 = inlined_call_operand.hbm [shape: f32[8,128], index: 10, kind: output, shape index: {}]
  %s11 = sld [smem:[#allocation0]]
  $region62: #{tpu_custom_call.1} parent=0
    _
  %s13 = ssub.s32 1, %s11
  %s14 = scalar_select 0, %s13, %s11
  $region1: #{tpu_custom_call.1} parent=0
    #allocation2 [shape = 'u8[163840]{0}', space=vmem, size = 0x28000, scoped, tag = 'input window, operand 4, single buffered']
    #allocation3 [shape = 's32[1]{0}', space=sflag, size = 0x4, scoped, tag = 'scoped memory for tpu_custom_call.1']
    #allocation4 [shape = 's32[1]{0}', space=sflag, size = 0x4, scoped, tag = 'scoped memory for tpu_custom_call.1']
    #allocation5 [shape = 'u8[32768]{0}', space=vmem, size = 0x8000, scoped, tag = 'input window, operand 6, single buffered']
    #allocation6 [shape = 's32[1]{0}', space=sflag, size = 0x4, scoped, tag = 'scoped memory for tpu_custom_call.1']
    #allocation7 [shape = 'u8[32768]{0}', space=vmem, size = 0x8000, scoped, tag = 'input window, operand 8, single buffered']
    #allocation8 [shape = 'u8[4096]{0}', space=vmem, size = 0x1000, scoped, tag = 'output window, operand 0, single buffered']
    %15 = vsyncpa [#allocation3], 0
    %16 = vsyncpa [#allocation6], 0
    %17 = vsyncpa [#allocation4], 0
    // Predicated region
    $region2: #{tpu_custom_call.1} parent=1 // pred_check
      _
    $region3: #{tpu_custom_call.1} parent=1 // pred_check_branch
      %19 = sbr.rel (0) target = $region5
    $region4: #{tpu_custom_call.1} parent=1 // pred_region
      _
    $region5: #{tpu_custom_call.1} parent=1 // pred_fallthru
      _
    // Predicated region
    $region6: #{tpu_custom_call.1} parent=1 // pred_check
      _
    $region7: #{tpu_custom_call.1} parent=1 // pred_check_branch
      %21 = sbr.rel (0) target = $region9
    $region8: #{tpu_custom_call.1} parent=1 // pred_region
      _
    $region9: #{tpu_custom_call.1} parent=1 // pred_fallthru
      _
    // Predicated region
    $region10: #{tpu_custom_call.1} parent=1 // pred_check
      _
    $region11: #{tpu_custom_call.1} parent=1 // pred_check_branch
      %23 = sbr.rel (0) target = $region13
    $region12: #{tpu_custom_call.1} parent=1 // pred_region
      _
    $region13: #{tpu_custom_call.1} parent=1 // pred_fallthru
      _
    // Predicated region
    $region14: #{tpu_custom_call.1} parent=1 // pred_check
      _
    $region15: #{tpu_custom_call.1} parent=1 // pred_check_branch
      %25 = sbr.rel (0) target = $region17
    $region16: #{tpu_custom_call.1} parent=1 // pred_region
      _
    $region17: #{tpu_custom_call.1} parent=1 // pred_fallthru
      _
    // Predicated region
    $region18: #{tpu_custom_call.1} parent=1 // pred_check
      _
    $region19: #{tpu_custom_call.1} parent=1 // pred_check_branch
      %27 = sbr.rel (0) target = $region21
    $region20: #{tpu_custom_call.1} parent=1 // pred_region
      %s29 = ssub.s32 5120, 5120
      %30 = vsyncadd [#allocation3], %s29
      %s31 = sshll.u32 [#allocation2], 4
      %s32 = int_to_ptr.vmem [resolvable:$true] %s31
      %37 = dma.hbm_to_vmem [thread:$0]  %s4, 5120, %s32, [#allocation3], 64, 64, 4
    $region21: #{tpu_custom_call.1} parent=1 // pred_fallthru
      _
    // Predicated region
    $region22: #{tpu_custom_call.1} parent=1 // pred_check
      _
    $region23: #{tpu_custom_call.1} parent=1 // pred_check_branch
      %39 = sbr.rel (0) target = $region25
    $region24: #{tpu_custom_call.1} parent=1 // pred_region
      _
    $region25: #{tpu_custom_call.1} parent=1 // pred_fallthru
      _
    // Predicated region
    $region26: #{tpu_custom_call.1} parent=1 // pred_check
      _
    $region27: #{tpu_custom_call.1} parent=1 // pred_check_branch
      %41 = sbr.rel (0) target = $region29
    $region28: #{tpu_custom_call.1} parent=1 // pred_region
      %s43 = ssub.s32 1024, 1024
      %44 = vsyncadd [#allocation6], %s43
      %s45 = sshll.u32 [#allocation5], 4
      %s46 = int_to_ptr.vmem [resolvable:$true] %s45
      %51 = dma.hbm_to_vmem [thread:$0]  %s6, 1024, %s46, [#allocation6], 64, 64, 4
    $region29: #{tpu_custom_call.1} parent=1 // pred_fallthru
      _
    // Predicated region
    $region30: #{tpu_custom_call.1} parent=1 // pred_check
      _
    $region31: #{tpu_custom_call.1} parent=1 // pred_check_branch
      %53 = sbr.rel (0) target = $region33
    $region32: #{tpu_custom_call.1} parent=1 // pred_region
      _
    $region33: #{tpu_custom_call.1} parent=1 // pred_fallthru
      _
    // Predicated region
    $region34: #{tpu_custom_call.1} parent=1 // pred_check
      _
    $region35: #{tpu_custom_call.1} parent=1 // pred_check_branch
      %55 = sbr.rel (0) target = $region37
    $region36: #{tpu_custom_call.1} parent=1 // pred_region
      %s57 = ssub.s32 1024, 1024
      %58 = vsyncadd [#allocation6], %s57
      %s59 = sshll.u32 [#allocation7], 4
      %s60 = int_to_ptr.vmem [resolvable:$true] %s59
      %65 = dma.hbm_to_vmem [thread:$0]  %s8, 1024, %s60, [#allocation6], 64, 64, 4
    $region37: #{tpu_custom_call.1} parent=1 // pred_fallthru
      _
    // Predicated region
    $region38: #{tpu_custom_call.1} parent=1 // pred_check
      _
    $region39: #{tpu_custom_call.1} parent=1 // pred_check_branch
      %67 = sbr.rel (0) target = $region41
    $region40: #{tpu_custom_call.1} parent=1 // pred_region
      _
    $region41: #{tpu_custom_call.1} parent=1 // pred_fallthru
      _
    // Predicated region
    $region42: #{tpu_custom_call.1} parent=1 // pred_check
      _
    $region43: #{tpu_custom_call.1} parent=1 // pred_check_branch
      %69 = sbr.rel (0) target = $region45
    $region44: #{tpu_custom_call.1} parent=1 // pred_region
      %70 = dma.done [#allocation3], 5120
    $region45: #{tpu_custom_call.1} parent=1 // pred_fallthru
      _
    // Predicated region
    $region46: #{tpu_custom_call.1} parent=1 // pred_check
      _
    $region47: #{tpu_custom_call.1} parent=1 // pred_check_branch
      %72 = sbr.rel (0) target = $region49
    $region48: #{tpu_custom_call.1} parent=1 // pred_region
      %73 = dma.done [#allocation6], 1024
    $region49: #{tpu_custom_call.1} parent=1 // pred_fallthru
      _
    // Predicated region
    $region50: #{tpu_custom_call.1} parent=1 // pred_check
      _
    $region51: #{tpu_custom_call.1} parent=1 // pred_check_branch
      %75 = sbr.rel (0) target = $region53
    $region52: #{tpu_custom_call.1} parent=1 // pred_region
      %76 = dma.done [#allocation6], 1024
    $region53: #{tpu_custom_call.1} parent=1 // pred_fallthru
      _
    %v78 = vld [vmem:[%s0] sm:$0xff]
    %v79 = vld [vmem:[%s1] sm:$0xff]
    %v80 = vld [vmem:[%s2] sm:$0x1]
    %82 = vset.pattern.permute.xlu0 0
    %83 = vperm.xlu0 %82, %v79
    %v84 = vpop.permute.xlu0 %83
    %v87 = vlaneseq
    %v88 = vshrl.u32 %v87, 7
    %v89 = vsub.s32 0, %v88
    %v90 = vrot.slane %v80, %v89
    %v92 = vmul.f32 %v84, %v90
    %v93 = vld [vmem:[%s3] sm:$0x1]
    %v95 = vlaneseq
    %v96 = vshrl.u32 %v95, 7
    %v97 = vsub.s32 0, %v96
    %v98 = vrot.slane %v93, %v97
    %v100 = vadd.f32 %v92, %v98
    %v101 = vxor.u32 %v100, 2147483648
    %v102 = vmul.f32 %v101, 1.442695
    %v103 = vpow.pop %v102
    %v104 = vadd.f32 %v103, 1.0
    %v105 = vrcp.pop %v104
    %v106 = vmul.f32 1.0, %v105
    %v107 = vmul.f32 %v100, %v106
    %v108 = vpack.c.bf16 %v107, %v107
    %v109 = vld [vmem:[#allocation2] sm:$0xf]
    %v110 = vld [vmem:[#allocation2 + $0x4] sm:$0xf]
    %v111 = vld [vmem:[#allocation2 + $0x8] sm:$0xf]
    %v112 = vld [vmem:[#allocation2 + $0xc] sm:$0xf]
    %v113 = vld [vmem:[#allocation2 + $0x10] sm:$0xf]
    %v114 = vld [vmem:[#allocation2 + $0x14] sm:$0xf]
    %v115 = vld [vmem:[#allocation2 + $0x18] sm:$0xf]
    %v116 = vld [vmem:[#allocation2 + $0x1c] sm:$0xf]
    %v117 = vld [vmem:[#allocation2 + $0x20] sm:$0xf]
    %v118 = vld [vmem:[#allocation2 + $0x24] sm:$0xf]
    %v119 = vld [vmem:[#allocation2 + $0x28] sm:$0xf]
    %v120 = vld [vmem:[#allocation2 + $0x2c] sm:$0xf]
    %v121 = vld [vmem:[#allocation2 + $0x30] sm:$0xf]
    %v122 = vld [vmem:[#allocation2 + $0x34] sm:$0xf]
    %v123 = vld [vmem:[#allocation2 + $0x38] sm:$0xf]
    %v124 = vld [vmem:[#allocation2 + $0x3c] sm:$0xf]
    %v125 = vld [vmem:[%s5] sm:$0x1]
    %v127 = vlaneseq
    %v128 = vshrl.u32 %v127, 7
    %v129 = vsub.s32 0, %v128
    %v130 = vrot.slane %v125, %v129
    %v148 = vunpack.c.l.b16 %v109
    %v149 = vunpack.c.l.b16 %v110
    %v150 = vunpack.c.l.b16 %v111
    %v151 = vunpack.c.l.b16 %v112
    %v152 = vunpack.c.l.b16 %v113
    %v153 = vunpack.c.l.b16 %v114
    %v154 = vunpack.c.l.b16 %v115
    %v155 = vunpack.c.l.b16 %v116
    %v156 = vunpack.c.l.b16 %v117
    %v157 = vunpack.c.l.b16 %v118
    %v158 = vunpack.c.l.b16 %v119
    %v159 = vunpack.c.l.b16 %v120
    %v160 = vunpack.c.l.b16 %v121
    %v161 = vunpack.c.l.b16 %v122
    %v162 = vunpack.c.l.b16 %v123
    %v163 = vunpack.c.l.b16 %v124
    %v164 = vpack.c.b16 %v149, %v148
    %v165 = vpack.c.b16 %v151, %v150
    %v166 = vpack.c.b16 %v153, %v152
    %v167 = vpack.c.b16 %v155, %v154
    %v168 = vpack.c.b16 %v157, %v156
    %v169 = vpack.c.b16 %v159, %v158
    %v170 = vpack.c.b16 %v161, %v160
    %v171 = vpack.c.b16 %v163, %v162
    %180 = vmatprep.subr.bf16.mxu0 0
    %181 = vmatpush1.bf16.msra.mxu0 %v164
    %182 = vmatprep.subr.bf16.mxu0 0
    %183 = vmatpush1.bf16.msra.mxu0 %v165
    %184 = vmatprep.subr.bf16.mxu0 0
    %185 = vmatpush1.bf16.msra.mxu0 %v166
    %186 = vmatprep.subr.bf16.mxu0 0
    %187 = vmatpush1.bf16.msra.mxu0 %v167
    %188 = vmatprep.subr.bf16.mxu0 0
    %189 = vmatpush1.bf16.msra.mxu0 %v168
    %190 = vmatprep.subr.bf16.mxu0 0
    %191 = vmatpush1.bf16.msra.mxu0 %v169
    %192 = vmatprep.subr.bf16.mxu0 0
    %193 = vmatpush1.bf16.msra.mxu0 %v170
    %194 = vmatprep.subr.bf16.mxu0 0
    %195 = vmatpush1.bf16.msra.mxu0 %v171
    %196 = vmatprep.subr.bf16.mxu0 0
    %197 = vmatpush1.bf16.msra.mxu0 0
    %198 = vmatprep.subr.bf16.mxu0 0
    %199 = vmatpush1.bf16.msra.mxu0 0
    %200 = vmatprep.subr.bf16.mxu0 0
    %201 = vmatpush1.bf16.msra.mxu0 0
    %202 = vmatprep.subr.bf16.mxu0 0
    %203 = vmatpush1.bf16.msra.mxu0 0
    %204 = vmatprep.subr.bf16.mxu0 0
    %205 = vmatpush1.bf16.msra.mxu0 0
    %206 = vmatprep.subr.bf16.mxu0 0
    %207 = vmatpush1.bf16.msra.mxu0 0
    %208 = vmatprep.subr.bf16.mxu0 0
    %209 = vmatpush1.bf16.msra.mxu0 0
    %210 = vmatprep.subr.bf16.mxu0 0
    %211 = vmatpush1.bf16.msra.mxu0 0
    %212 = vmatprep.mubr.bf16.mxu0 0
    %213 = vmatmul.mubr.bf16.gmra.mrb[0].mxu0 %v108
    %v214 = vpop.f32.mrb[0].mxu0
    %v215 = vadd.f32 %v130, %v214
    %v216 = vpop.f32.mrb[0].mxu0
    %v217 = vpop.f32.mrb[0].mxu0
    %v218 = vpop.f32.mrb[0].mxu0
    %219 = vdwg.mxu0
    %v220 = vxor.u32 %v215, 2147483648
    %v221 = vmul.f32 %v220, 1.442695
    %v222 = vpow.pop %v221
    %v223 = vadd.f32 %v222, 1.0
    %v224 = vrcp.pop %v223
    %v225 = vmul.f32 1.0, %v224
    %v226 = vmul.f32 %v215, %v225
    %v227 = vadd.f32 %v107, %v226
    %v228 = vpack.c.bf16 %v227, %v227
    %s229 = scalar_lea.vmem [#allocation2], 64
    %v230 = vld [vmem:[%s229] sm:$0xf]
    %v231 = vld [vmem:[%s229 + $0x4] sm:$0xf]
    %v232 = vld [vmem:[%s229 + $0x8] sm:$0xf]
    %v233 = vld [vmem:[%s229 + $0xc] sm:$0xf]
    %v234 = vld [vmem:[%s229 + $0x10] sm:$0xf]
    %v235 = vld [vmem:[%s229 + $0x14] sm:$0xf]
    %v236 = vld [vmem:[%s229 + $0x18] sm:$0xf]
    %v237 = vld [vmem:[%s229 + $0x1c] sm:$0xf]
    %v238 = vld [vmem:[%s229 + $0x20] sm:$0xf]
    %v239 = vld [vmem:[%s229 + $0x24] sm:$0xf]
    %v240 = vld [vmem:[%s229 + $0x28] sm:$0xf]
    %v241 = vld [vmem:[%s229 + $0x2c] sm:$0xf]
    %v242 = vld [vmem:[%s229 + $0x30] sm:$0xf]
    %v243 = vld [vmem:[%s229 + $0x34] sm:$0xf]
    %v244 = vld [vmem:[%s229 + $0x38] sm:$0xf]
    %v245 = vld [vmem:[%s229 + $0x3c] sm:$0xf]
    %s246 = scalar_lea.vmem %s5, 1
    %v247 = vld [vmem:[%s246] sm:$0x1]
    %v249 = vlaneseq
    %v250 = vshrl.u32 %v249, 7
    %v251 = vsub.s32 0, %v250
    %v252 = vrot.slane %v247, %v251
    %v270 = vunpack.c.l.b16 %v230
    %v271 = vunpack.c.l.b16 %v231
    %v272 = vunpack.c.l.b16 %v232
    %v273 = vunpack.c.l.b16 %v233
    %v274 = vunpack.c.l.b16 %v234
    %v275 = vunpack.c.l.b16 %v235
    %v276 = vunpack.c.l.b16 %v236
    %v277 = vunpack.c.l.b16 %v237
    %v278 = vunpack.c.l.b16 %v238
    %v279 = vunpack.c.l.b16 %v239
    %v280 = vunpack.c.l.b16 %v240
    %v281 = vunpack.c.l.b16 %v241
    %v282 = vunpack.c.l.b16 %v242
    %v283 = vunpack.c.l.b16 %v243
    %v284 = vunpack.c.l.b16 %v244
    %v285 = vunpack.c.l.b16 %v245
    %v286 = vpack.c.b16 %v271, %v270
    %v287 = vpack.c.b16 %v273, %v272
    %v288 = vpack.c.b16 %v275, %v274
    %v289 = vpack.c.b16 %v277, %v276
    %v290 = vpack.c.b16 %v279, %v278
    %v291 = vpack.c.b16 %v281, %v280
    %v292 = vpack.c.b16 %v283, %v282
    %v293 = vpack.c.b16 %v285, %v284
    %302 = vmatprep.subr.bf16.mxu0 0
    %303 = vmatpush1.bf16.msra.mxu0 %v286
    %304 = vmatprep.subr.bf16.mxu0 0
    %305 = vmatpush1.bf16.msra.mxu0 %v287
    %306 = vmatprep.subr.bf16.mxu0 0
    %307 = vmatpush1.bf16.msra.mxu0 %v288
    %308 = vmatprep.subr.bf16.mxu0 0
    %309 = vmatpush1.bf16.msra.mxu0 %v289
    %310 = vmatprep.subr.bf16.mxu0 0
    %311 = vmatpush1.bf16.msra.mxu0 %v290
    %312 = vmatprep.subr.bf16.mxu0 0
    %313 = vmatpush1.bf16.msra.mxu0 %v291
    %314 = vmatprep.subr.bf16.mxu0 0
    %315 = vmatpush1.bf16.msra.mxu0 %v292
    %316 = vmatprep.subr.bf16.mxu0 0
    %317 = vmatpush1.bf16.msra.mxu0 %v293
    %318 = vmatprep.subr.bf16.mxu0 0
    %319 = vmatpush1.bf16.msra.mxu0 0
    %320 = vmatprep.subr.bf16.mxu0 0
    %321 = vmatpush1.bf16.msra.mxu0 0
    %322 = vmatprep.subr.bf16.mxu0 0
    %323 = vmatpush1.bf16.msra.mxu0 0
    %324 = vmatprep.subr.bf16.mxu0 0
    %325 = vmatpush1.bf16.msra.mxu0 0
    %326 = vmatprep.subr.bf16.mxu0 0
    %327 = vmatpush1.bf16.msra.mxu0 0
    %328 = vmatprep.subr.bf16.mxu0 0
    %329 = vmatpush1.bf16.msra.mxu0 0
    %330 = vmatprep.subr.bf16.mxu0 0
    %331 = vmatpush1.bf16.msra.mxu0 0
    %332 = vmatprep.subr.bf16.mxu0 0
    %333 = vmatpush1.bf16.msra.mxu0 0
    %334 = vmatprep.mubr.bf16.mxu0 0
    %335 = vmatmul.mubr.bf16.gmra.mrb[0].mxu0 %v228
    %v336 = vpop.f32.mrb[0].mxu0
    %v337 = vadd.f32 %v252, %v336
    %v338 = vpop.f32.mrb[0].mxu0
    %v339 = vpop.f32.mrb[0].mxu0
    %v340 = vpop.f32.mrb[0].mxu0
    %341 = vdwg.mxu0
    %v342 = vxor.u32 %v337, 2147483648
    %v343 = vmul.f32 %v342, 1.442695
    %v344 = vpow.pop %v343
    %v345 = vadd.f32 %v344, 1.0
    %v346 = vrcp.pop %v345
    %v347 = vmul.f32 1.0, %v346
    %v348 = vmul.f32 %v337, %v347
    %v349 = vadd.f32 %v227, %v348
    %v350 = vpack.c.bf16 %v349, %v349
    %s351 = scalar_lea.vmem [#allocation2], 128
    %v352 = vld [vmem:[%s351] sm:$0xf]
    %v353 = vld [vmem:[%s351 + $0x4] sm:$0xf]
    %v354 = vld [vmem:[%s351 + $0x8] sm:$0xf]
    %v355 = vld [vmem:[%s351 + $0xc] sm:$0xf]
    %v356 = vld [vmem:[%s351 + $0x10] sm:$0xf]
    %v357 = vld [vmem:[%s351 + $0x14] sm:$0xf]
    %v358 = vld [vmem:[%s351 + $0x18] sm:$0xf]
    %v359 = vld [vmem:[%s351 + $0x1c] sm:$0xf]
    %v360 = vld [vmem:[%s351 + $0x20] sm:$0xf]
    %v361 = vld [vmem:[%s351 + $0x24] sm:$0xf]
    %v362 = vld [vmem:[%s351 + $0x28] sm:$0xf]
    %v363 = vld [vmem:[%s351 + $0x2c] sm:$0xf]
    %v364 = vld [vmem:[%s351 + $0x30] sm:$0xf]
    %v365 = vld [vmem:[%s351 + $0x34] sm:$0xf]
    %v366 = vld [vmem:[%s351 + $0x38] sm:$0xf]
    %v367 = vld [vmem:[%s351 + $0x3c] sm:$0xf]
    %s368 = scalar_lea.vmem %s5, 2
    %v369 = vld [vmem:[%s368] sm:$0x1]
    %v371 = vlaneseq
    %v372 = vshrl.u32 %v371, 7
    %v373 = vsub.s32 0, %v372
    %v374 = vrot.slane %v369, %v373
    %v392 = vunpack.c.l.b16 %v352
    %v393 = vunpack.c.l.b16 %v353
    %v394 = vunpack.c.l.b16 %v354
    %v395 = vunpack.c.l.b16 %v355
    %v396 = vunpack.c.l.b16 %v356
    %v397 = vunpack.c.l.b16 %v357
    %v398 = vunpack.c.l.b16 %v358
    %v399 = vunpack.c.l.b16 %v359
    %v400 = vunpack.c.l.b16 %v360
    %v401 = vunpack.c.l.b16 %v361
    %v402 = vunpack.c.l.b16 %v362
    %v403 = vunpack.c.l.b16 %v363
    %v404 = vunpack.c.l.b16 %v364
    %v405 = vunpack.c.l.b16 %v365
    %v406 = vunpack.c.l.b16 %v366
    %v407 = vunpack.c.l.b16 %v367
    %v408 = vpack.c.b16 %v393, %v392
    %v409 = vpack.c.b16 %v395, %v394
    %v410 = vpack.c.b16 %v397, %v396
    %v411 = vpack.c.b16 %v399, %v398
    %v412 = vpack.c.b16 %v401, %v400
    %v413 = vpack.c.b16 %v403, %v402
    %v414 = vpack.c.b16 %v405, %v404
    %v415 = vpack.c.b16 %v407, %v406
    %424 = vmatprep.subr.bf16.mxu0 0
    %425 = vmatpush1.bf16.msra.mxu0 %v408
    %426 = vmatprep.subr.bf16.mxu0 0
    %427 = vmatpush1.bf16.msra.mxu0 %v409
    %428 = vmatprep.subr.bf16.mxu0 0
    %429 = vmatpush1.bf16.msra.mxu0 %v410
    %430 = vmatprep.subr.bf16.mxu0 0
    %431 = vmatpush1.bf16.msra.mxu0 %v411
    %432 = vmatprep.subr.bf16.mxu0 0
    %433 = vmatpush1.bf16.msra.mxu0 %v412
    %434 = vmatprep.subr.bf16.mxu0 0
    %435 = vmatpush1.bf16.msra.mxu0 %v413
    %436 = vmatprep.subr.bf16.mxu0 0
    %437 = vmatpush1.bf16.msra.mxu0 %v414
    %438 = vmatprep.subr.bf16.mxu0 0
    %439 = vmatpush1.bf16.msra.mxu0 %v415
    %440 = vmatprep.subr.bf16.mxu0 0
    %441 = vmatpush1.bf16.msra.mxu0 0
    %442 = vmatprep.subr.bf16.mxu0 0
    %443 = vmatpush1.bf16.msra.mxu0 0
    %444 = vmatprep.subr.bf16.mxu0 0
    %445 = vmatpush1.bf16.msra.mxu0 0
    %446 = vmatprep.subr.bf16.mxu0 0
    %447 = vmatpush1.bf16.msra.mxu0 0
    %448 = vmatprep.subr.bf16.mxu0 0
    %449 = vmatpush1.bf16.msra.mxu0 0
    %450 = vmatprep.subr.bf16.mxu0 0
    %451 = vmatpush1.bf16.msra.mxu0 0
    %452 = vmatprep.subr.bf16.mxu0 0
    %453 = vmatpush1.bf16.msra.mxu0 0
    %454 = vmatprep.subr.bf16.mxu0 0
    %455 = vmatpush1.bf16.msra.mxu0 0
    %456 = vmatprep.mubr.bf16.mxu0 0
    %457 = vmatmul.mubr.bf16.gmra.mrb[0].mxu0 %v350
    %v458 = vpop.f32.mrb[0].mxu0
    %v459 = vadd.f32 %v374, %v458
    %v460 = vpop.f32.mrb[0].mxu0
    %v461 = vpop.f32.mrb[0].mxu0
    %v462 = vpop.f32.mrb[0].mxu0
    %463 = vdwg.mxu0
    %v464 = vxor.u32 %v459, 2147483648
    %v465 = vmul.f32 %v464, 1.442695
    %v466 = vpow.pop %v465
    %v467 = vadd.f32 %v466, 1.0
    %v468 = vrcp.pop %v467
    %v469 = vmul.f32 1.0, %v468
    %v470 = vmul.f32 %v459, %v469
    %v471 = vadd.f32 %v349, %v470
    %v472 = vpack.c.bf16 %v471, %v471
    %s473 = scalar_lea.vmem [#allocation2], 192
    %v474 = vld [vmem:[%s473] sm:$0xf]
    %v475 = vld [vmem:[%s473 + $0x4] sm:$0xf]
    %v476 = vld [vmem:[%s473 + $0x8] sm:$0xf]
    %v477 = vld [vmem:[%s473 + $0xc] sm:$0xf]
    %v478 = vld [vmem:[%s473 + $0x10] sm:$0xf]
    %v479 = vld [vmem:[%s473 + $0x14] sm:$0xf]
    %v480 = vld [vmem:[%s473 + $0x18] sm:$0xf]
    %v481 = vld [vmem:[%s473 + $0x1c] sm:$0xf]
    %v482 = vld [vmem:[%s473 + $0x20] sm:$0xf]
    %v483 = vld [vmem:[%s473 + $0x24] sm:$0xf]
    %v484 = vld [vmem:[%s473 + $0x28] sm:$0xf]
    %v485 = vld [vmem:[%s473 + $0x2c] sm:$0xf]
    %v486 = vld [vmem:[%s473 + $0x30] sm:$0xf]
    %v487 = vld [vmem:[%s473 + $0x34] sm:$0xf]
    %v488 = vld [vmem:[%s473 + $0x38] sm:$0xf]
    %v489 = vld [vmem:[%s473 + $0x3c] sm:$0xf]
    %s490 = scalar_lea.vmem %s5, 3
    %v491 = vld [vmem:[%s490] sm:$0x1]
    %v493 = vlaneseq
    %v494 = vshrl.u32 %v493, 7
    %v495 = vsub.s32 0, %v494
    %v496 = vrot.slane %v491, %v495
    %v514 = vunpack.c.l.b16 %v474
    %v515 = vunpack.c.l.b16 %v475
    %v516 = vunpack.c.l.b16 %v476
    %v517 = vunpack.c.l.b16 %v477
    %v518 = vunpack.c.l.b16 %v478
    %v519 = vunpack.c.l.b16 %v479
    %v520 = vunpack.c.l.b16 %v480
    %v521 = vunpack.c.l.b16 %v481
    %v522 = vunpack.c.l.b16 %v482
    %v523 = vunpack.c.l.b16 %v483
    %v524 = vunpack.c.l.b16 %v484
    %v525 = vunpack.c.l.b16 %v485
    %v526 = vunpack.c.l.b16 %v486
    %v527 = vunpack.c.l.b16 %v487
    %v528 = vunpack.c.l.b16 %v488
    %v529 = vunpack.c.l.b16 %v489
    %v530 = vpack.c.b16 %v515, %v514
    %v531 = vpack.c.b16 %v517, %v516
    %v532 = vpack.c.b16 %v519, %v518
    %v533 = vpack.c.b16 %v521, %v520
    %v534 = vpack.c.b16 %v523, %v522
    %v535 = vpack.c.b16 %v525, %v524
    %v536 = vpack.c.b16 %v527, %v526
    %v537 = vpack.c.b16 %v529, %v528
    %546 = vmatprep.subr.bf16.mxu0 0
    %547 = vmatpush1.bf16.msra.mxu0 %v530
    %548 = vmatprep.subr.bf16.mxu0 0
    %549 = vmatpush1.bf16.msra.mxu0 %v531
    %550 = vmatprep.subr.bf16.mxu0 0
    %551 = vmatpush1.bf16.msra.mxu0 %v532
    %552 = vmatprep.subr.bf16.mxu0 0
    %553 = vmatpush1.bf16.msra.mxu0 %v533
    %554 = vmatprep.subr.bf16.mxu0 0
    %555 = vmatpush1.bf16.msra.mxu0 %v534
    %556 = vmatprep.subr.bf16.mxu0 0
    %557 = vmatpush1.bf16.msra.mxu0 %v535
    %558 = vmatprep.subr.bf16.mxu0 0
    %559 = vmatpush1.bf16.msra.mxu0 %v536
    %560 = vmatprep.subr.bf16.mxu0 0
    %561 = vmatpush1.bf16.msra.mxu0 %v537
    %562 = vmatprep.subr.bf16.mxu0 0
    %563 = vmatpush1.bf16.msra.mxu0 0
    %564 = vmatprep.subr.bf16.mxu0 0
    %565 = vmatpush1.bf16.msra.mxu0 0
    %566 = vmatprep.subr.bf16.mxu0 0
    %567 = vmatpush1.bf16.msra.mxu0 0
    %568 = vmatprep.subr.bf16.mxu0 0
    %569 = vmatpush1.bf16.msra.mxu0 0
    %570 = vmatprep.subr.bf16.mxu0 0
    %571 = vmatpush1.bf16.msra.mxu0 0
    %572 = vmatprep.subr.bf16.mxu0 0
    %573 = vmatpush1.bf16.msra.mxu0 0
    %574 = vmatprep.subr.bf16.mxu0 0
    %575 = vmatpush1.bf16.msra.mxu0 0
    %576 = vmatprep.subr.bf16.mxu0 0
    %577 = vmatpush1.bf16.msra.mxu0 0
    %578 = vmatprep.mubr.bf16.mxu0 0
    %579 = vmatmul.mubr.bf16.gmra.mrb[0].mxu0 %v472
    %v580 = vpop.f32.mrb[0].mxu0
    %v581 = vadd.f32 %v496, %v580
    %v582 = vpop.f32.mrb[0].mxu0
    %v583 = vpop.f32.mrb[0].mxu0
    %v584 = vpop.f32.mrb[0].mxu0
    %585 = vdwg.mxu0
    %v586 = vxor.u32 %v581, 2147483648
    %v587 = vmul.f32 %v586, 1.442695
    %v588 = vpow.pop %v587
    %v589 = vadd.f32 %v588, 1.0
    %v590 = vrcp.pop %v589
    %v591 = vmul.f32 1.0, %v590
    %v592 = vmul.f32 %v581, %v591
    %v593 = vadd.f32 %v471, %v592
    %v594 = vpack.c.bf16 %v593, %v593
    %s595 = scalar_lea.vmem [#allocation2], 256
    %v596 = vld [vmem:[%s595] sm:$0xf]
    %v597 = vld [vmem:[%s595 + $0x4] sm:$0xf]
    %v598 = vld [vmem:[%s595 + $0x8] sm:$0xf]
    %v599 = vld [vmem:[%s595 + $0xc] sm:$0xf]
    %v600 = vld [vmem:[%s595 + $0x10] sm:$0xf]
    %v601 = vld [vmem:[%s595 + $0x14] sm:$0xf]
    %v602 = vld [vmem:[%s595 + $0x18] sm:$0xf]
    %v603 = vld [vmem:[%s595 + $0x1c] sm:$0xf]
    %v604 = vld [vmem:[%s595 + $0x20] sm:$0xf]
    %v605 = vld [vmem:[%s595 + $0x24] sm:$0xf]
    %v606 = vld [vmem:[%s595 + $0x28] sm:$0xf]
    %v607 = vld [vmem:[%s595 + $0x2c] sm:$0xf]
    %v608 = vld [vmem:[%s595 + $0x30] sm:$0xf]
    %v609 = vld [vmem:[%s595 + $0x34] sm:$0xf]
    %v610 = vld [vmem:[%s595 + $0x38] sm:$0xf]
    %v611 = vld [vmem:[%s595 + $0x3c] sm:$0xf]
    %s612 = scalar_lea.vmem %s5, 4
    %v613 = vld [vmem:[%s612] sm:$0x1]
    %v615 = vlaneseq
    %v616 = vshrl.u32 %v615, 7
    %v617 = vsub.s32 0, %v616
    %v618 = vrot.slane %v613, %v617
    %v636 = vunpack.c.l.b16 %v596
    %v637 = vunpack.c.l.b16 %v597
    %v638 = vunpack.c.l.b16 %v598
    %v639 = vunpack.c.l.b16 %v599
    %v640 = vunpack.c.l.b16 %v600
    %v641 = vunpack.c.l.b16 %v601
    %v642 = vunpack.c.l.b16 %v602
    %v643 = vunpack.c.l.b16 %v603
    %v644 = vunpack.c.l.b16 %v604
    %v645 = vunpack.c.l.b16 %v605
    %v646 = vunpack.c.l.b16 %v606
    %v647 = vunpack.c.l.b16 %v607
    %v648 = vunpack.c.l.b16 %v608
    %v649 = vunpack.c.l.b16 %v609
    %v650 = vunpack.c.l.b16 %v610
    %v651 = vunpack.c.l.b16 %v611
    %v652 = vpack.c.b16 %v637, %v636
    %v653 = vpack.c.b16 %v639, %v638
    %v654 = vpack.c.b16 %v641, %v640
    %v655 = vpack.c.b16 %v643, %v642
    %v656 = vpack.c.b16 %v645, %v644
    %v657 = vpack.c.b16 %v647, %v646
    %v658 = vpack.c.b16 %v649, %v648
    %v659 = vpack.c.b16 %v651, %v650
    %668 = vmatprep.subr.bf16.mxu0 0
    %669 = vmatpush1.bf16.msra.mxu0 %v652
    %670 = vmatprep.subr.bf16.mxu0 0
    %671 = vmatpush1.bf16.msra.mxu0 %v653
    %672 = vmatprep.subr.bf16.mxu0 0
    %673 = vmatpush1.bf16.msra.mxu0 %v654
    %674 = vmatprep.subr.bf16.mxu0 0
    %675 = vmatpush1.bf16.msra.mxu0 %v655
    %676 = vmatprep.subr.bf16.mxu0 0
    %677 = vmatpush1.bf16.msra.mxu0 %v656
    %678 = vmatprep.subr.bf16.mxu0 0
    %679 = vmatpush1.bf16.msra.mxu0 %v657
    %680 = vmatprep.subr.bf16.mxu0 0
    %681 = vmatpush1.bf16.msra.mxu0 %v658
    %682 = vmatprep.subr.bf16.mxu0 0
    %683 = vmatpush1.bf16.msra.mxu0 %v659
    %684 = vmatprep.subr.bf16.mxu0 0
    %685 = vmatpush1.bf16.msra.mxu0 0
    %686 = vmatprep.subr.bf16.mxu0 0
    %687 = vmatpush1.bf16.msra.mxu0 0
    %688 = vmatprep.subr.bf16.mxu0 0
    %689 = vmatpush1.bf16.msra.mxu0 0
    %690 = vmatprep.subr.bf16.mxu0 0
    %691 = vmatpush1.bf16.msra.mxu0 0
    %692 = vmatprep.subr.bf16.mxu0 0
    %693 = vmatpush1.bf16.msra.mxu0 0
    %694 = vmatprep.subr.bf16.mxu0 0
    %695 = vmatpush1.bf16.msra.mxu0 0
    %696 = vmatprep.subr.bf16.mxu0 0
    %697 = vmatpush1.bf16.msra.mxu0 0
    %698 = vmatprep.subr.bf16.mxu0 0
    %699 = vmatpush1.bf16.msra.mxu0 0
    %700 = vmatprep.mubr.bf16.mxu0 0
    %701 = vmatmul.mubr.bf16.gmra.mrb[0].mxu0 %v594
    %v702 = vpop.f32.mrb[0].mxu0
    %v703 = vadd.f32 %v618, %v702
    %v704 = vpop.f32.mrb[0].mxu0
    %v705 = vpop.f32.mrb[0].mxu0
    %v706 = vpop.f32.mrb[0].mxu0
    %707 = vdwg.mxu0
    %v708 = vxor.u32 %v703, 2147483648
    %v709 = vmul.f32 %v708, 1.442695
    %v710 = vpow.pop %v709
    %v711 = vadd.f32 %v710, 1.0
    %v712 = vrcp.pop %v711
    %v713 = vmul.f32 1.0, %v712
    %v714 = vmul.f32 %v703, %v713
    %v715 = vadd.f32 %v593, %v714
    %v716 = vpack.c.bf16 %v715, %v715
    %v717 = vld [vmem:[#allocation5] sm:$0xf]
    %v718 = vld [vmem:[#allocation5 + $0x4] sm:$0xf]
    %v719 = vld [vmem:[#allocation5 + $0x8] sm:$0xf]
    %v720 = vld [vmem:[#allocation5 + $0xc] sm:$0xf]
    %v721 = vld [vmem:[#allocation5 + $0x10] sm:$0xf]
    %v722 = vld [vmem:[#allocation5 + $0x14] sm:$0xf]
    %v723 = vld [vmem:[#allocation5 + $0x18] sm:$0xf]
    %v724 = vld [vmem:[#allocation5 + $0x1c] sm:$0xf]
    %v725 = vld [vmem:[#allocation5 + $0x20] sm:$0xf]
    %v726 = vld [vmem:[#allocation5 + $0x24] sm:$0xf]
    %v727 = vld [vmem:[#allocation5 + $0x28] sm:$0xf]
    %v728 = vld [vmem:[#allocation5 + $0x2c] sm:$0xf]
    %v729 = vld [vmem:[#allocation5 + $0x30] sm:$0xf]
    %v730 = vld [vmem:[#allocation5 + $0x34] sm:$0xf]
    %v731 = vld [vmem:[#allocation5 + $0x38] sm:$0xf]
    %v732 = vld [vmem:[#allocation5 + $0x3c] sm:$0xf]
    %v733 = vld [vmem:[%s7] sm:$0x1]
    %v735 = vlaneseq
    %v736 = vshrl.u32 %v735, 7
    %v737 = vsub.s32 0, %v736
    %v738 = vrot.slane %v733, %v737
    %v756 = vunpack.c.l.b16 %v717
    %v757 = vunpack.c.l.b16 %v718
    %v758 = vunpack.c.l.b16 %v719
    %v759 = vunpack.c.l.b16 %v720
    %v760 = vunpack.c.l.b16 %v721
    %v761 = vunpack.c.l.b16 %v722
    %v762 = vunpack.c.l.b16 %v723
    %v763 = vunpack.c.l.b16 %v724
    %v764 = vunpack.c.l.b16 %v725
    %v765 = vunpack.c.l.b16 %v726
    %v766 = vunpack.c.l.b16 %v727
    %v767 = vunpack.c.l.b16 %v728
    %v768 = vunpack.c.l.b16 %v729
    %v769 = vunpack.c.l.b16 %v730
    %v770 = vunpack.c.l.b16 %v731
    %v771 = vunpack.c.l.b16 %v732
    %v772 = vpack.c.b16 %v757, %v756
    %v773 = vpack.c.b16 %v759, %v758
    %v774 = vpack.c.b16 %v761, %v760
    %v775 = vpack.c.b16 %v763, %v762
    %v776 = vpack.c.b16 %v765, %v764
    %v777 = vpack.c.b16 %v767, %v766
    %v778 = vpack.c.b16 %v769, %v768
    %v779 = vpack.c.b16 %v771, %v770
    %788 = vmatprep.subr.bf16.mxu0 0
    %789 = vmatpush1.bf16.msra.mxu0 %v772
    %790 = vmatprep.subr.bf16.mxu0 0
    %791 = vmatpush1.bf16.msra.mxu0 %v773
    %792 = vmatprep.subr.bf16.mxu0 0
    %793 = vmatpush1.bf16.msra.mxu0 %v774
    %794 = vmatprep.subr.bf16.mxu0 0
    %795 = vmatpush1.bf16.msra.mxu0 %v775
    %796 = vmatprep.subr.bf16.mxu0 0
    %797 = vmatpush1.bf16.msra.mxu0 %v776
    %798 = vmatprep.subr.bf16.mxu0 0
    %799 = vmatpush1.bf16.msra.mxu0 %v777
    %800 = vmatprep.subr.bf16.mxu0 0
    %801 = vmatpush1.bf16.msra.mxu0 %v778
    %802 = vmatprep.subr.bf16.mxu0 0
    %803 = vmatpush1.bf16.msra.mxu0 %v779
    %804 = vmatprep.subr.bf16.mxu0 0
    %805 = vmatpush1.bf16.msra.mxu0 0
    %806 = vmatprep.subr.bf16.mxu0 0
    %807 = vmatpush1.bf16.msra.mxu0 0
    %808 = vmatprep.subr.bf16.mxu0 0
    %809 = vmatpush1.bf16.msra.mxu0 0
    %810 = vmatprep.subr.bf16.mxu0 0
    %811 = vmatpush1.bf16.msra.mxu0 0
    %812 = vmatprep.subr.bf16.mxu0 0
    %813 = vmatpush1.bf16.msra.mxu0 0
    %814 = vmatprep.subr.bf16.mxu0 0
    %815 = vmatpush1.bf16.msra.mxu0 0
    %816 = vmatprep.subr.bf16.mxu0 0
    %817 = vmatpush1.bf16.msra.mxu0 0
    %818 = vmatprep.subr.bf16.mxu0 0
    %819 = vmatpush1.bf16.msra.mxu0 0
    %820 = vmatprep.mubr.bf16.mxu0 0
    %821 = vmatmul.mubr.bf16.gmra.mrb[0].mxu0 %v716
    %v822 = vpop.f32.mrb[0].mxu0
    %v823 = vadd.f32 %v738, %v822
    %v824 = vpop.f32.mrb[0].mxu0
    %v825 = vpop.f32.mrb[0].mxu0
    %v826 = vpop.f32.mrb[0].mxu0
    %827 = vdwg.mxu0
    %v828 = vadd.f32 %v78, %v823
    %v829 = vxor.u32 %v828, 2147483648
    %v830 = vmul.f32 %v829, 1.442695
    %v831 = vpow.pop %v830
    %v832 = vadd.f32 %v831, 1.0
    %v833 = vrcp.pop %v832
    %v834 = vmul.f32 1.0, %v833
    %v835 = vmul.f32 %v828, %v834
    %v836 = vpack.c.bf16 %v835, %v835
    %v837 = vld [vmem:[#allocation7] sm:$0xf]
    %v838 = vld [vmem:[#allocation7 + $0x4] sm:$0xf]
    %v839 = vld [vmem:[#allocation7 + $0x8] sm:$0xf]
    %v840 = vld [vmem:[#allocation7 + $0xc] sm:$0xf]
    %v841 = vld [vmem:[#allocation7 + $0x10] sm:$0xf]
    %v842 = vld [vmem:[#allocation7 + $0x14] sm:$0xf]
    %v843 = vld [vmem:[#allocation7 + $0x18] sm:$0xf]
    %v844 = vld [vmem:[#allocation7 + $0x1c] sm:$0xf]
    %v845 = vld [vmem:[#allocation7 + $0x20] sm:$0xf]
    %v846 = vld [vmem:[#allocation7 + $0x24] sm:$0xf]
    %v847 = vld [vmem:[#allocation7 + $0x28] sm:$0xf]
    %v848 = vld [vmem:[#allocation7 + $0x2c] sm:$0xf]
    %v849 = vld [vmem:[#allocation7 + $0x30] sm:$0xf]
    %v850 = vld [vmem:[#allocation7 + $0x34] sm:$0xf]
    %v851 = vld [vmem:[#allocation7 + $0x38] sm:$0xf]
    %v852 = vld [vmem:[#allocation7 + $0x3c] sm:$0xf]
    %v853 = vld [vmem:[%s9] sm:$0x1]
    %v855 = vlaneseq
    %v856 = vshrl.u32 %v855, 7
    %v857 = vsub.s32 0, %v856
    %v858 = vrot.slane %v853, %v857
    %v876 = vunpack.c.l.b16 %v837
    %v877 = vunpack.c.l.b16 %v838
    %v878 = vunpack.c.l.b16 %v839
    %v879 = vunpack.c.l.b16 %v840
    %v880 = vunpack.c.l.b16 %v841
    %v881 = vunpack.c.l.b16 %v842
    %v882 = vunpack.c.l.b16 %v843
    %v883 = vunpack.c.l.b16 %v844
    %v884 = vunpack.c.l.b16 %v845
    %v885 = vunpack.c.l.b16 %v846
    %v886 = vunpack.c.l.b16 %v847
    %v887 = vunpack.c.l.b16 %v848
    %v888 = vunpack.c.l.b16 %v849
    %v889 = vunpack.c.l.b16 %v850
    %v890 = vunpack.c.l.b16 %v851
    %v891 = vunpack.c.l.b16 %v852
    %v892 = vpack.c.b16 %v877, %v876
    %v893 = vpack.c.b16 %v879, %v878
    %v894 = vpack.c.b16 %v881, %v880
    %v895 = vpack.c.b16 %v883, %v882
    %v896 = vpack.c.b16 %v885, %v884
    %v897 = vpack.c.b16 %v887, %v886
    %v898 = vpack.c.b16 %v889, %v888
    %v899 = vpack.c.b16 %v891, %v890
    %908 = vmatprep.subr.bf16.mxu0 0
    %909 = vmatpush1.bf16.msra.mxu0 %v892
    %910 = vmatprep.subr.bf16.mxu0 0
    %911 = vmatpush1.bf16.msra.mxu0 %v893
    %912 = vmatprep.subr.bf16.mxu0 0
    %913 = vmatpush1.bf16.msra.mxu0 %v894
    %914 = vmatprep.subr.bf16.mxu0 0
    %915 = vmatpush1.bf16.msra.mxu0 %v895
    %916 = vmatprep.subr.bf16.mxu0 0
    %917 = vmatpush1.bf16.msra.mxu0 %v896
    %918 = vmatprep.subr.bf16.mxu0 0
    %919 = vmatpush1.bf16.msra.mxu0 %v897
    %920 = vmatprep.subr.bf16.mxu0 0
    %921 = vmatpush1.bf16.msra.mxu0 %v898
    %922 = vmatprep.subr.bf16.mxu0 0
    %923 = vmatpush1.bf16.msra.mxu0 %v899
    %924 = vmatprep.subr.bf16.mxu0 0
    %925 = vmatpush1.bf16.msra.mxu0 0
    %926 = vmatprep.subr.bf16.mxu0 0
    %927 = vmatpush1.bf16.msra.mxu0 0
    %928 = vmatprep.subr.bf16.mxu0 0
    %929 = vmatpush1.bf16.msra.mxu0 0
    %930 = vmatprep.subr.bf16.mxu0 0
    %931 = vmatpush1.bf16.msra.mxu0 0
    %932 = vmatprep.subr.bf16.mxu0 0
    %933 = vmatpush1.bf16.msra.mxu0 0
    %934 = vmatprep.subr.bf16.mxu0 0
    %935 = vmatpush1.bf16.msra.mxu0 0
    %936 = vmatprep.subr.bf16.mxu0 0
    %937 = vmatpush1.bf16.msra.mxu0 0
    %938 = vmatprep.subr.bf16.mxu0 0
    %939 = vmatpush1.bf16.msra.mxu0 0
    %940 = vmatprep.mubr.bf16.mxu0 0
    %941 = vmatmul.mubr.bf16.gmra.mrb[0].mxu0 %v836
    %v942 = vpop.f32.mrb[0].mxu0
    %v943 = vadd.f32 %v858, %v942
    %v944 = vpop.f32.mrb[0].mxu0
    %v945 = vpop.f32.mrb[0].mxu0
    %v946 = vpop.f32.mrb[0].mxu0
    %947 = vdwg.mxu0
    %v948 = vmul.f32 %v79, 10.0
    %v949 = vmul.f32 %v948, %v948
    %v950 = vadd.f32 %v949, 0.25
    %v951 = vrsqrt.pop %v950
    %v952 = vmul.f32 %v951, %v951
    %v953 = vmul.f32 %v952, 0.25
    %v954 = vand.u32 2147483647, %v948
    %v955 = vmul.f32 %v954, %v951
    %v956 = vmul.f32 %v955, 0.5
    %958 = vset.pattern.permute.xlu0 0
    %959 = vperm.xlu0 %958, %v953
    %v960 = vpop.permute.xlu0 %959
    %v962 = vmul.f32 %v78, %v960
    %964 = vset.pattern.permute.xlu0 0
    %965 = vperm.xlu0 %964, %v956
    %v966 = vpop.permute.xlu0 %965
    %v968 = vmul.f32 %v943, %v966
    %v969 = vadd.f32 %v962, %v968
    %970 = vst [vmem:[#allocation8] sm:$0xff] %v969
    // Predicated region
    $region54: #{tpu_custom_call.1} parent=1 // pred_check
      _
    $region55: #{tpu_custom_call.1} parent=1 // pred_check_branch
      %972 = sbr.rel (0) target = $region57
    $region56: #{tpu_custom_call.1} parent=1 // pred_region
      %s974 = ssub.s32 128, 128
      %975 = vsyncadd [#allocation4], %s974
      %s977 = sshll.u32 [#allocation8], 4
      %s978 = int_to_ptr.vmem [resolvable:$true] %s977
      %980 = dma.vmem_to_hbm [thread:$0]  %s978, 128, %s10, [#allocation4]
    $region57: #{tpu_custom_call.1} parent=1 // pred_fallthru
      _
    // Predicated region
    $region58: #{tpu_custom_call.1} parent=1 // pred_check
      _
    $region59: #{tpu_custom_call.1} parent=1 // pred_check_branch
      %982 = sbr.rel (0) target = $region61
    $region60: #{tpu_custom_call.1} parent=1 // pred_region
      %983 = dma.done [#allocation4], 128
    $region61: #{tpu_custom_call.1} parent=1 // pred_fallthru
      _
    %984 = vsyncpa [#allocation3], 1
    %985 = vsyncpa [#allocation6], 1
    %986 = vsyncpa [#allocation4], 1

</llo_original>
